<compile_context>
chip_gen: v7x
topology: tpu7x:2x2x1
jax: 0.10.0
libtpu: 0.0.40
codegen_flags: <defaults>
</compile_context>

<pallas_src>
import functools

import jax
import jax.numpy as jnp
from jax import lax
from jax.experimental import pallas as pl
from jax.experimental.pallas import tpu as pltpu


_VMEM_LIMIT_BYTES = 48 * 1024 * 1024   # < v7x 64 MiB physical, > all scoped defaults
_VMEM_BUDGET_BYTES = 36 * 1024 * 1024  # target working set for tile selection


# --------------------------------------------------------------------------- #
# Kernel 1: fused V/K/Q projection (1x1 convs as one token-major matmul)
# --------------------------------------------------------------------------- #
def _proj_kernel(x_ref, w_ref, b_ref, v_ref, k_ref, q_ref, *, c, cq):
    # x_ref: (1, tn, C) bf16 tokens
    # w_ref: (C, C + 2*Cq) bf16 fused [Wv^T | Wk^T | Wq^T]
    # b_ref: (1, C + 2*Cq) f32 fused bias
    acts = jnp.dot(x_ref[0], w_ref[...], preferred_element_type=jnp.float32)
    acts = (acts + b_ref[...]).astype(jnp.bfloat16)
    # V first so the wide slice is a pure truncation; K/Q slices are narrow.
    v_ref[0] = acts[:, :c]
    k_ref[0] = acts[:, c:c + cq]
    q_ref[0] = acts[:, c + cq:]


# --------------------------------------------------------------------------- #
# Kernel 2: flash-attention (online softmax) + gamma residual
# --------------------------------------------------------------------------- #
def _flash_attn_kernel(q_ref, k_ref, v_ref, xres_ref, gamma_ref, o_ref,
                       m_scr, l_scr, acc_scr):
    # q_ref   : (1, tq, Cq) bf16   queries for this row tile
    # k_ref   : (1, tk, Cq) bf16   keys for this kv tile
    # v_ref   : (1, tk, C)  bf16   values for this kv tile
    # xres_ref: (1, tq, C)  f32    residual rows (fetched once per (b, qi))
    # gamma   : (1,)        f32    SMEM scalar
    kj = pl.program_id(2)

    @pl.when(kj == 0)
    def _():
        m_scr[...] = jnp.full_like(m_scr, -jnp.inf)
        l_scr[...] = jnp.zeros_like(l_scr)
        acc_scr[...] = jnp.zeros_like(acc_scr)

    # energy[i, j] = q_i . k_j  -> (tq, tk), f32 accumulation on the MXU
    e = lax.dot_general(q_ref[0], k_ref[0], (((1,), (1,)), ((), ())),
                        preferred_element_type=jnp.float32)

    m_prev = m_scr[...]
    m_new = jnp.maximum(m_prev, jnp.max(e, axis=-1, keepdims=True))   # (tq, 1)
    alpha = jnp.exp(m_prev - m_new)                                   # (tq, 1)
    p = jnp.exp(e - m_new)                                            # (tq, tk) f32
    l_scr[...] = alpha * l_scr[...] + jnp.sum(p, axis=-1, keepdims=True)
    acc_scr[...] = alpha * acc_scr[...] + jnp.dot(
        p.astype(jnp.bfloat16), v_ref[0], preferred_element_type=jnp.float32)
    m_scr[...] = m_new

    @pl.when(kj == pl.num_programs(2) - 1)
    def _():
        # deferred softmax normalization (EUP approx reciprocal) + residual
        inv_l = pl.reciprocal(l_scr[...], approx=True)
        o_ref[0] = gamma_ref[0] * (acc_scr[...] * inv_l) + xres_ref[0]


# --------------------------------------------------------------------------- #
# Tile selection
# --------------------------------------------------------------------------- #
def _choose_tile(n, cap, min_tiles=1):
    """Largest divisor of n that is a multiple of 8, <= cap and yields at least
    `min_tiles` tiles.  Falls back to the full extent n (always a legal block
    dim) if no such divisor exists."""
    best = None
    t = 8
    while t <= min(n, cap):
        if n % t == 0 and n // t >= min_tiles:
            best = t
        t += 8
    return best if best is not None else n


def _attn_tiles(n, c, cq, batch):
    """VMEM-budget-aware (tq, tk) selection for the flash-attention kernel."""
    min_q_tiles = 2 if batch < 2 else 1   # keep both v7x TensorCores busy
    tq_cap = tk_cap = 512
    while True:
        tq = _choose_tile(n, tq_cap, min_q_tiles)
        tk = _choose_tile(n, tk_cap)
        footprint = (
            2 * tq * c * 4         # residual double buffer (f32)
            + 2 * tq * cq * 2      # q double buffer (bf16)
            + 2 * tk * cq * 2      # k double buffer (bf16)
            + 2 * tk * c * 2       # v double buffer (bf16)
            + 2 * tq * c * 4       # output double buffer (f32)
            + tq * 8 + tq * c * 4  # m / l / acc scratch
            + 3 * tq * tk * 4)     # e / p temporaries
        if footprint <= _VMEM_BUDGET_BYTES or (tq_cap <= 8 and tk_cap <= 8):
            return tq, tk
        if tk_cap >= tq_cap and tk_cap > 8:
            tk_cap //= 2
        else:
            tq_cap //= 2


# --------------------------------------------------------------------------- #
# Wrapper
# --------------------------------------------------------------------------- #
def self_attention(x_nchw, wq, bq, wk, bk, wv, bv, gamma):
    """x_nchw: (B, C, W, H) float32.  Returns (B, C, W, H) float32."""
    B, C, W, H = x_nchw.shape
    N = W * H
    Cq = wq.shape[0]

    # token-major activations (B, N, C); bf16 copy for MXU operands,
    # f32 kept only for the residual path.
    x_tok = jnp.transpose(x_nchw.reshape(B, C, N), (0, 2, 1)).astype(jnp.float32)
    x_tok_b = x_tok.astype(jnp.bfloat16)

    # fused projection weight / bias: [ Wv^T | Wk^T | Wq^T ] -> (C, C + 2*Cq)
    w_fused = jnp.concatenate([wv.T, wk.T, wq.T], axis=1).astype(jnp.bfloat16)
    b_fused = jnp.concatenate([bv, bk, bq]).reshape(1, C + 2 * Cq).astype(jnp.float32)
    gamma1 = jnp.asarray(gamma, jnp.float32).reshape(1)

    # ---- kernel 1: fused V/K/Q projection, once per token ------------------
    tn = _choose_tile(N, 512)
    v_all, k_all, q_all = pl.pallas_call(
        functools.partial(_proj_kernel, c=C, cq=Cq),
        out_shape=(jax.ShapeDtypeStruct((B, N, C), jnp.bfloat16),
                   jax.ShapeDtypeStruct((B, N, Cq), jnp.bfloat16),
                   jax.ShapeDtypeStruct((B, N, Cq), jnp.bfloat16)),
        grid_spec=pltpu.PrefetchScalarGridSpec(
            num_scalar_prefetch=0,
            grid=(B, N // tn),
            in_specs=[
                pl.BlockSpec((1, tn, C), lambda b, i: (b, i, 0)),        # x (bf16)
                pl.BlockSpec((C, C + 2 * Cq), lambda b, i: (0, 0)),      # fused W
                pl.BlockSpec((1, C + 2 * Cq), lambda b, i: (0, 0)),      # fused bias
            ],
            out_specs=[
                pl.BlockSpec((1, tn, C), lambda b, i: (b, i, 0)),        # V
                pl.BlockSpec((1, tn, Cq), lambda b, i: (b, i, 0)),       # K
                pl.BlockSpec((1, tn, Cq), lambda b, i: (b, i, 0)),       # Q
            ]),
        compiler_params=pltpu.CompilerParams(
            dimension_semantics=("parallel", "parallel"),
            vmem_limit_bytes=_VMEM_LIMIT_BYTES),
    )(x_tok_b, w_fused, b_fused)

    # ---- kernel 2: flash attention + gamma residual -------------------------
    tq, tk = _attn_tiles(N, C, Cq, B)
    out_tok = pl.pallas_call(
        _flash_attn_kernel,
        out_shape=jax.ShapeDtypeStruct((B, N, C), jnp.float32),
        grid_spec=pltpu.PrefetchScalarGridSpec(
            num_scalar_prefetch=0,
            grid=(B, N // tq, N // tk),
            in_specs=[
                pl.BlockSpec((1, tq, Cq), lambda b, qi, kj: (b, qi, 0)),  # q
                pl.BlockSpec((1, tk, Cq), lambda b, qi, kj: (b, kj, 0)),  # k
                pl.BlockSpec((1, tk, C), lambda b, qi, kj: (b, kj, 0)),   # v
                pl.BlockSpec((1, tq, C), lambda b, qi, kj: (b, qi, 0)),   # residual
                pl.BlockSpec(memory_space=pltpu.MemorySpace.SMEM),        # gamma
            ],
            out_specs=pl.BlockSpec((1, tq, C), lambda b, qi, kj: (b, qi, 0)),
            scratch_shapes=[
                pltpu.VMEM((tq, 1), jnp.float32),   # m (running max)
                pltpu.VMEM((tq, 1), jnp.float32),   # l (running denominator)
                pltpu.VMEM((tq, C), jnp.float32),   # acc (running PV)
            ]),
        compiler_params=pltpu.CompilerParams(
            dimension_semantics=("parallel", "parallel", "arbitrary"),
            vmem_limit_bytes=_VMEM_LIMIT_BYTES),
    )(q_all, k_all, v_all, x_tok, gamma1)

    return jnp.transpose(out_tok, (0, 2, 1)).reshape(B, C, W, H)


# --------------------------------------------------------------------------- #
# Pure-JAX reference (mirrors the PyTorch module)
# --------------------------------------------------------------------------- #
def _reference(x_nchw, wq, bq, wk, bk, wv, bv, gamma):
    B, C, W, H = x_nchw.shape
    N = W * H
    x = x_nchw.reshape(B, C, N)
    q = jnp.einsum('oc,bcn->bon', wq, x) + bq[None, :, None]   # (B, Cq, N)
    k = jnp.einsum('oc,bcn->bon', wk, x) + bk[None, :, None]   # (B, Cq, N)
    v = jnp.einsum('oc,bcn->bon', wv, x) + bv[None, :, None]   # (B, C,  N)
    energy = jnp.einsum('bci,bcj->bij', q, k)                  # (B, N, N)
    attn = jax.nn.softmax(energy, axis=-1)
    out = jnp.einsum('bcj,bij->bci', v, attn)                  # (B, C, N)
    out = gamma * out + x
    return out.reshape(B, C, W, H)


if __name__ == "__main__":
    # N = 1024 -> 2 query tiles x 2 kv tiles: exercises the online-softmax loop
    # and gives a >= 2-way parallel grid per batch.
    B, C, W, H = 2, 16, 32, 32
    Cq = C // 8

    key = jax.random.PRNGKey(0)
    kx, kwq, kbq, kwk, kbk, kwv, kbv = jax.random.split(key, 7)

    x = jax.random.normal(kx, (B, C, W, H), dtype=jnp.float32)
    wq = jax.random.normal(kwq, (Cq, C), dtype=jnp.float32) * 0.1
    bq = jax.random.normal(kbq, (Cq,), dtype=jnp.float32) * 0.1
    wk = jax.random.normal(kwk, (Cq, C), dtype=jnp.float32) * 0.1
    bk = jax.random.normal(kbk, (Cq,), dtype=jnp.float32) * 0.1
    wv = jax.random.normal(kwv, (C, C), dtype=jnp.float32) * 0.1
    bv = jax.random.normal(kbv, (C,), dtype=jnp.float32) * 0.1
    # nn.Parameter(torch.zeros(1)) in __init__; nonzero here so the attention
    # path is actually exercised in the output.
    gamma = jnp.float32(0.5)

    out = self_attention(x, wq, bq, wk, bk, wv, bv, gamma)
    out = jax.block_until_ready(out)

    ref = _reference(x, wq, bq, wk, bk, wv, bv, gamma)
    assert out.shape == (B, C, W, H)
    # bf16 MXU operands (f32 accumulation) -> loosened tolerance vs. f32 ref.
    assert jnp.allclose(out, ref, atol=5e-2, rtol=5e-2), "mismatch vs reference"

    print("KERNEL_OK")
</pallas_src>

<mosaic_0001>
module attributes {stable_mosaic.version = 11 : i64} {
  func.func @_proj_kernel(%arg0: i32, %arg1: i32, %arg2: memref<1x512x16xbf16, #tpu.memory_space<vmem>>, %arg3: memref<16x20xbf16, #tpu.memory_space<vmem>>, %arg4: memref<1x20xf32, #tpu.memory_space<vmem>>, %arg5: memref<1x512x16xbf16, #tpu.memory_space<vmem>>, %arg6: memref<1x512x2xbf16, #tpu.memory_space<vmem>>, %arg7: memref<1x512x2xbf16, #tpu.memory_space<vmem>>) attributes {dimension_semantics = [#tpu.dimension_semantics<parallel>, #tpu.dimension_semantics<parallel>], iteration_bounds = array<i64: 2, 2>, scalar_prefetch = 0 : i64, scratch_operands = 0 : i64, tpu.core_type = #tpu.core_type<tc>, window_params = [{transform_indices = @transform_0, window_bounds = array<i64: 1, 512, 16>}, {pipeline_mode = #tpu.pipeline_mode<synchronous>, transform_indices = @transform_1, window_bounds = array<i64: 16, 20>}, {pipeline_mode = #tpu.pipeline_mode<synchronous>, transform_indices = @transform_2, window_bounds = array<i64: 1, 20>}, {transform_indices = @transform_3, window_bounds = array<i64: 1, 512, 16>}, {transform_indices = @transform_4, window_bounds = array<i64: 1, 512, 2>}, {transform_indices = @transform_5, window_bounds = array<i64: 1, 512, 2>}]} {
    %c0 = arith.constant 0 : index
    %c0_0 = arith.constant 0 : index
    %c0_1 = arith.constant 0 : index
    %0 = vector.load %arg2[%c0, %c0_0, %c0_1] : memref<1x512x16xbf16, #tpu.memory_space<vmem>>, vector<1x512x16xbf16>
    %1 = vector.shape_cast %0 : vector<1x512x16xbf16> to vector<512x16xbf16>
    %c0_2 = arith.constant 0 : index
    %c0_3 = arith.constant 0 : index
    %2 = vector.load %arg3[%c0_2, %c0_3] : memref<16x20xbf16, #tpu.memory_space<vmem>>, vector<16x20xbf16>
    %cst = arith.constant dense<0.000000e+00> : vector<512x20xf32>
    %3 = tpu.matmul %1, %2, %cst {dimension_numbers = #tpu.dot_dimension_numbers<[1], [0], [0], [1], [0, 0, 1, 1], [], []>} : vector<512x16xbf16>, vector<16x20xbf16>, vector<512x20xf32> -> vector<512x20xf32>
    %c0_4 = arith.constant 0 : index
    %c0_5 = arith.constant 0 : index
    %4 = vector.load %arg4[%c0_4, %c0_5] : memref<1x20xf32, #tpu.memory_space<vmem>>, vector<1x20xf32>
    %5 = vector.broadcast %4 : vector<1x20xf32> to vector<512x20xf32>
    %6 = arith.addf %3, %5 : vector<512x20xf32>
    %7 = arith.truncf %6 : vector<512x20xf32> to vector<512x20xbf16>
    %8 = vector.extract_strided_slice %7 {offsets = [0, 0], sizes = [512, 16], strides = [1, 1]} : vector<512x20xbf16> to vector<512x16xbf16>
    %c0_6 = arith.constant 0 : index
    %c0_7 = arith.constant 0 : index
    %c0_8 = arith.constant 0 : index
    %9 = vector.load %arg5[%c0_6, %c0_7, %c0_8] : memref<1x512x16xbf16, #tpu.memory_space<vmem>>, vector<1x512x16xbf16>
    %10 = vector.shape_cast %9 : vector<1x512x16xbf16> to vector<512x16xbf16>
    %11 = vector.shape_cast %8 : vector<512x16xbf16> to vector<1x512x16xbf16>
    tpu.vector_store %arg5[%c0_6, %c0_7, %c0_8], %11 {strides = array<i32>} : memref<1x512x16xbf16, #tpu.memory_space<vmem>>, vector<1x512x16xbf16>,
    %12 = vector.extract_strided_slice %7 {offsets = [0, 16], sizes = [512, 2], strides = [1, 1]} : vector<512x20xbf16> to vector<512x2xbf16>
    %c0_9 = arith.constant 0 : index
    %c0_10 = arith.constant 0 : index
    %c0_11 = arith.constant 0 : index
    %13 = vector.load %arg6[%c0_9, %c0_10, %c0_11] : memref<1x512x2xbf16, #tpu.memory_space<vmem>>, vector<1x512x2xbf16>
    %14 = vector.shape_cast %13 : vector<1x512x2xbf16> to vector<512x2xbf16>
    %15 = vector.shape_cast %12 : vector<512x2xbf16> to vector<1x512x2xbf16>
    tpu.vector_store %arg6[%c0_9, %c0_10, %c0_11], %15 {strides = array<i32>} : memref<1x512x2xbf16, #tpu.memory_space<vmem>>, vector<1x512x2xbf16>,
    %16 = vector.extract_strided_slice %7 {offsets = [0, 18], sizes = [512, 2], strides = [1, 1]} : vector<512x20xbf16> to vector<512x2xbf16>
    %c0_12 = arith.constant 0 : index
    %c0_13 = arith.constant 0 : index
    %c0_14 = arith.constant 0 : index
    %17 = vector.load %arg7[%c0_12, %c0_13, %c0_14] : memref<1x512x2xbf16, #tpu.memory_space<vmem>>, vector<1x512x2xbf16>
    %18 = vector.shape_cast %17 : vector<1x512x2xbf16> to vector<512x2xbf16>
    %19 = vector.shape_cast %16 : vector<512x2xbf16> to vector<1x512x2xbf16>
    tpu.vector_store %arg7[%c0_12, %c0_13, %c0_14], %19 {strides = array<i32>} : memref<1x512x2xbf16, #tpu.memory_space<vmem>>, vector<1x512x2xbf16>,
    return
  }
  func.func @transform_0(%arg0: i32, %arg1: i32) -> (i32, i32, i32) {
    %c0_i32 = arith.constant 0 : i32
    %c0_i32_0 = arith.constant 0 : i32
    return %arg0, %arg1, %c0_i32 : i32, i32, i32
  }
  func.func @transform_1(%arg0: i32, %arg1: i32) -> (i32, i32) {
    %c0_i32 = arith.constant 0 : i32
    %c0_i32_0 = arith.constant 0 : i32
    %c0_i32_1 = arith.constant 0 : i32
    return %c0_i32, %c0_i32_0 : i32, i32
  }
  func.func @transform_2(%arg0: i32, %arg1: i32) -> (i32, i32) {
    %c0_i32 = arith.constant 0 : i32
    %c0_i32_0 = arith.constant 0 : i32
    %c0_i32_1 = arith.constant 0 : i32
    return %c0_i32, %c0_i32_0 : i32, i32
  }
  func.func @transform_3(%arg0: i32, %arg1: i32) -> (i32, i32, i32) {
    %c0_i32 = arith.constant 0 : i32
    %c0_i32_0 = arith.constant 0 : i32
    return %arg0, %arg1, %c0_i32 : i32, i32, i32
  }
  func.func @transform_4(%arg0: i32, %arg1: i32) -> (i32, i32, i32) {
    %c0_i32 = arith.constant 0 : i32
    %c0_i32_0 = arith.constant 0 : i32
    return %arg0, %arg1, %c0_i32 : i32, i32, i32
  }
  func.func @transform_5(%arg0: i32, %arg1: i32) -> (i32, i32, i32) {
    %c0_i32 = arith.constant 0 : i32
    %c0_i32_0 = arith.constant 0 : i32
    return %arg0, %arg1, %c0_i32 : i32, i32, i32
  }
}

</mosaic_0001>

<llo_original>
// kernel: tpu_custom_call.1
$region0: #{tpu_custom_call.1}
  #allocation0 [shape = 'u32[]', space=smem, size = 0x4, offset = 0x4, fixed_abs, tag = 'smem constant byte address 0x4 - core index']
  #allocation1 [shape = 'u32[144,128]{1,0:T(1,128)}', space=vmem, size = 0x12000, scoped, tag = 'internal scratch']
  %s0 = inlined_call_operand.vmem [shape: bf16[2,1024,16], index: 0, kind: input, shape index: {}]
  %s1 = inlined_call_operand.vmem [shape: bf16[16,20], index: 1, kind: input, shape index: {}]
  %s2 = inlined_call_operand.vmem [shape: f32[1,20], index: 2, kind: input, shape index: {}]
  %s3 = inlined_call_operand.vmem [shape: bf16[2,1024,16], index: 3, kind: output, shape index: {0}]
  %s4 = inlined_call_operand.vmem [shape: bf16[2,1024,2], index: 4, kind: output, shape index: {1}]
  %s5 = inlined_call_operand.vmem [shape: bf16[2,1024,2], index: 5, kind: output, shape index: {2}]
  %6 = xla_tuple %s3, %s4, %s5
  %s7 = sld [smem:[#allocation0]]
  $region61: #{tpu_custom_call.1} parent=0
    _
  %s9 = ssub.s32 1, %s7
  %s10 = scalar_select 0, %s9, %s7
  loop: start=0, step=1, limit=6
  $region2: #{tpu_custom_call.1} parent=0 // loop_pre_header
    _
  $region3: #{tpu_custom_call.1} parent=0 // loop_header
    %s12 = sphi 0, %s16
    %p13 = scmp.ge.s32.totalorder %s12, 6
    %s19 = sphi 0, %s31
    %s20 = sphi 0, %s27
    %s21 = sphi 0, %s19
    %s22 = sphi 0, %s20
    %s23 = sphi 0, %s21
    %s24 = sphi 0, %s22
    %s36 = sphi 0, %s38
    %s39 = sphi 0, %s36
    %s40 = sphi 0, %s39
    %s56 = sphi 0, %s40
    %s60 = sphi 0, %s60
    %s62 = sphi 0, %s60
    %s63 = sphi 0, %s62
    %s77 = sphi 0, %s63
    %s81 = sphi 0, %s81
    %s83 = sphi 0, %s81
    %s84 = sphi 0, %s83
    %s98 = sphi 0, %s84
    %s106 = sphi 0, %s108
    %s109 = sphi 0, %s106
    %s110 = sphi 0, %s109
    %s126 = sphi 0, %s110
    %s134 = sphi 0, %s136
    %s137 = sphi 0, %s134
    %s138 = sphi 0, %s137
    %s154 = sphi 0, %s138
    %s162 = sphi 0, %s164
    %s165 = sphi 0, %s162
    %s166 = sphi 0, %s165
    %s182 = sphi 0, %s166
  $region4: #{tpu_custom_call.1} parent=0 // loop_header_branch
    %15 = sbr.rel (%p13) target = $region8
  $region5: #{tpu_custom_call.1} parent=0 // loop_body
    %s17 = ssub.s32 %s12, 1
    %s18 = ssub.s32 %s12, 2
    %s25 = sadd.s32 1, %s20
    %p26 = scmp.ge.s32.totalorder %s25, 2
    %s27 = scalar_select %p26, 0, %s25
    %s28 = sadd.s32 1, %s19
    %s29 = scalar_select %p26, %s28, %s19
    %p30 = scmp.ge.s32.totalorder %s29, 2
    %s31 = scalar_select %p30, 0, %s29
    %s32 = ssub.s32 %s19, %s31
    %s33 = ssub.s32 %s20, %s27
    %s34 = sor.u32 %s32, %s33
    %p35 = scmp.eq.s32.totalorder %s34, 0
    %s37 = sadd.s32 %s36, 1
    %s38 = scalar_select %p35, %s36, %s37
    %p41 = pneg %p35
    %p42 = scmp.eq.s32.totalorder %s12, 3
    %p43 = por %p41, %p42
    %p44 = scmp.ne.s32.totalorder %s36, %s39
    %p45 = scmp.eq.s32.totalorder %s12, 0
    %p46 = por %p44, %p45
    %p47 = scmp.ne.s32.totalorder %s36, %s39
    %p48 = scmp.eq.s32.totalorder %s17, 3
    %p49 = por %p47, %p48
    %p50 = scmp.ne.s32.totalorder %s39, %s40
    %p51 = scmp.eq.s32.totalorder %s17, 0
    %p52 = por %p50, %p51
    %p53 = scmp.ne.s32.totalorder %s39, %s40
    %p54 = scmp.eq.s32.totalorder %s18, 3
    %p55 = por %p53, %p54
    %p57 = scmp.ne.s32.totalorder %s40, %s56
    %p58 = scmp.eq.s32.totalorder %s18, 0
    %p59 = por %p57, %p58
    %s61 = sadd.s32 %s60, 1
    %p64 = scmp.eq.s32.totalorder %s12, 3
    %p65 = scmp.ne.s32.totalorder %s60, %s62
    %p66 = scmp.eq.s32.totalorder %s12, 0
    %p67 = por %p65, %p66
    %p68 = scmp.ne.s32.totalorder %s60, %s62
    %p69 = scmp.eq.s32.totalorder %s17, 3
    %p70 = por %p68, %p69
    %p71 = scmp.ne.s32.totalorder %s62, %s63
    %p72 = scmp.eq.s32.totalorder %s17, 0
    %p73 = por %p71, %p72
    %p74 = scmp.ne.s32.totalorder %s62, %s63
    %p75 = scmp.eq.s32.totalorder %s18, 3
    %p76 = por %p74, %p75
    %p78 = scmp.ne.s32.totalorder %s63, %s77
    %p79 = scmp.eq.s32.totalorder %s18, 0
    %p80 = por %p78, %p79
    %s82 = sadd.s32 %s81, 1
    %p85 = scmp.eq.s32.totalorder %s12, 3
    %p86 = scmp.ne.s32.totalorder %s81, %s83
    %p87 = scmp.eq.s32.totalorder %s12, 0
    %p88 = por %p86, %p87
    %p89 = scmp.ne.s32.totalorder %s81, %s83
    %p90 = scmp.eq.s32.totalorder %s17, 3
    %p91 = por %p89, %p90
    %p92 = scmp.ne.s32.totalorder %s83, %s84
    %p93 = scmp.eq.s32.totalorder %s17, 0
    %p94 = por %p92, %p93
    %p95 = scmp.ne.s32.totalorder %s83, %s84
    %p96 = scmp.eq.s32.totalorder %s18, 3
    %p97 = por %p95, %p96
    %p99 = scmp.ne.s32.totalorder %s84, %s98
    %p100 = scmp.eq.s32.totalorder %s18, 0
    %p101 = por %p99, %p100
    %s102 = ssub.s32 %s19, %s31
    %s103 = ssub.s32 %s20, %s27
    %s104 = sor.u32 %s102, %s103
    %p105 = scmp.eq.s32.totalorder %s104, 0
    %s107 = sadd.s32 %s106, 1
    %s108 = scalar_select %p105, %s106, %s107
    %p111 = pneg %p105
    %p112 = scmp.eq.s32.totalorder %s12, 3
    %p113 = por %p111, %p112
    %p114 = scmp.ne.s32.totalorder %s106, %s109
    %p115 = scmp.eq.s32.totalorder %s12, 0
    %p116 = por %p114, %p115
    %p117 = scmp.ne.s32.totalorder %s106, %s109
    %p118 = scmp.eq.s32.totalorder %s17, 3
    %p119 = por %p117, %p118
    %p120 = scmp.ne.s32.totalorder %s109, %s110
    %p121 = scmp.eq.s32.totalorder %s17, 0
    %p122 = por %p120, %p121
    %p123 = scmp.ne.s32.totalorder %s109, %s110
    %p124 = scmp.eq.s32.totalorder %s18, 3
    %p125 = por %p123, %p124
    %p127 = scmp.ne.s32.totalorder %s110, %s126
    %p128 = scmp.eq.s32.totalorder %s18, 0
    %p129 = por %p127, %p128
    %s130 = ssub.s32 %s19, %s31
    %s131 = ssub.s32 %s20, %s27
    %s132 = sor.u32 %s130, %s131
    %p133 = scmp.eq.s32.totalorder %s132, 0
    %s135 = sadd.s32 %s134, 1
    %s136 = scalar_select %p133, %s134, %s135
    %p139 = pneg %p133
    %p140 = scmp.eq.s32.totalorder %s12, 3
    %p141 = por %p139, %p140
    %p142 = scmp.ne.s32.totalorder %s134, %s137
    %p143 = scmp.eq.s32.totalorder %s12, 0
    %p144 = por %p142, %p143
    %p145 = scmp.ne.s32.totalorder %s134, %s137
    %p146 = scmp.eq.s32.totalorder %s17, 3
    %p147 = por %p145, %p146
    %p148 = scmp.ne.s32.totalorder %s137, %s138
    %p149 = scmp.eq.s32.totalorder %s17, 0
    %p150 = por %p148, %p149
    %p151 = scmp.ne.s32.totalorder %s137, %s138
    %p152 = scmp.eq.s32.totalorder %s18, 3
    %p153 = por %p151, %p152
    %p155 = scmp.ne.s32.totalorder %s138, %s154
    %p156 = scmp.eq.s32.totalorder %s18, 0
    %p157 = por %p155, %p156
    %s158 = ssub.s32 %s19, %s31
    %s159 = ssub.s32 %s20, %s27
    %s160 = sor.u32 %s158, %s159
    %p161 = scmp.eq.s32.totalorder %s160, 0
    %s163 = sadd.s32 %s162, 1
    %s164 = scalar_select %p161, %s162, %s163
    %p167 = pneg %p161
    %p168 = scmp.eq.s32.totalorder %s12, 3
    %p169 = por %p167, %p168
    %p170 = scmp.ne.s32.totalorder %s162, %s165
    %p171 = scmp.eq.s32.totalorder %s12, 0
    %p172 = por %p170, %p171
    %p173 = scmp.ne.s32.totalorder %s162, %s165
    %p174 = scmp.eq.s32.totalorder %s17, 3
    %p175 = por %p173, %p174
    %p176 = scmp.ne.s32.totalorder %s165, %s166
    %p177 = scmp.eq.s32.totalorder %s17, 0
    %p178 = por %p176, %p177
    %p179 = scmp.ne.s32.totalorder %s165, %s166
    %p180 = scmp.eq.s32.totalorder %s18, 3
    %p181 = por %p179, %p180
    %p183 = scmp.ne.s32.totalorder %s166, %s182
    %p184 = scmp.eq.s32.totalorder %s18, 0
    %p185 = por %p183, %p184
    %p186 = scmp.le.s32.totalorder 1, %s12
    %p187 = scmp.lt.s32.totalorder %s12, 5
    %p188 = pnand %p186, %p187
    %p189 = pneg %p188
    // Predicated region
    $region9: #{tpu_custom_call.1} parent=5 // pred_check
      _
    $region10: #{tpu_custom_call.1} parent=5 // pred_check_branch
      %191 = sbr.rel (%p188) target = $region12
    $region11: #{tpu_custom_call.1} parent=5 // pred_region
      %s192 = ssub.s32 %s12, 1
      // Predicated region
      $region13: #{tpu_custom_call.1} parent=11 // pred_check
        %p193 = pneg %p73
      $region14: #{tpu_custom_call.1} parent=11 // pred_check_branch
        %195 = sbr.rel (%p193) target = $region16
      $region15: #{tpu_custom_call.1} parent=11 // pred_region
        _
      $region16: #{tpu_custom_call.1} parent=11 // pred_fallthru
        _
      // Predicated region
      $region17: #{tpu_custom_call.1} parent=11 // pred_check
        %p196 = pneg %p94
      $region18: #{tpu_custom_call.1} parent=11 // pred_check_branch
        %198 = sbr.rel (%p196) target = $region20
      $region19: #{tpu_custom_call.1} parent=11 // pred_region
        _
      $region20: #{tpu_custom_call.1} parent=11 // pred_fallthru
        _
    $region12: #{tpu_custom_call.1} parent=5 // pred_fallthru
      _
    %p199 = scmp.lt.s32.totalorder %s12, 4
    // Predicated region
    $region21: #{tpu_custom_call.1} parent=5 // pred_check
      %p200 = pneg %p199
    $region22: #{tpu_custom_call.1} parent=5 // pred_check_branch
      %202 = sbr.rel (%p200) target = $region24
    $region23: #{tpu_custom_call.1} parent=5 // pred_region
      // Predicated region
      $region25: #{tpu_custom_call.1} parent=23 // pred_check
        %p203 = pneg %p46
      $region26: #{tpu_custom_call.1} parent=23 // pred_check_branch
        %205 = sbr.rel (%p203) target = $region28
      $region27: #{tpu_custom_call.1} parent=23 // pred_region
        %s206 = smul.u32 64, %s20
        %p207 = scmp.lt.s32.totalorder %s19, 1
        %s208 = scalar_select %p207, %s19, 1
        %p209 = scmp.lt.s32.totalorder %s206, 127
        %s210 = scalar_select %p209, %s206, 127
        %s211 = smul.addr %s208, 128
        %s212 = sadd.s32 %s210, %s211
        %s213 = smul.addr %s212, 4
        %s214 = scalar_lea.vmem %s0, %s213
        %s215 = smul.u32 64, %s20
      $region28: #{tpu_custom_call.1} parent=23 // pred_fallthru
        _
    $region24: #{tpu_custom_call.1} parent=5 // pred_fallthru
      _
    %p216 = scmp.le.s32.totalorder 1, %s12
    %p217 = scmp.lt.s32.totalorder %s12, 5
    %p218 = pnand %p216, %p217
    %p219 = pneg %p218
    // Predicated region
    $region29: #{tpu_custom_call.1} parent=5 // pred_check
      _
    $region30: #{tpu_custom_call.1} parent=5 // pred_check_branch
      %221 = sbr.rel (%p218) target = $region32
    $region31: #{tpu_custom_call.1} parent=5 // pred_region
      %s222 = ssub.s32 %s12, 1
      %s223 = smul.u32 64, %s22
      %p224 = scmp.lt.s32.totalorder %s21, 1
      %s225 = scalar_select %p224, %s21, 1
      %p226 = scmp.lt.s32.totalorder %s223, 127
      %s227 = scalar_select %p226, %s223, 127
      %s228 = smul.addr %s225, 128
      %s229 = sadd.s32 %s227, %s228
      %s230 = smul.addr %s229, 4
      %s231 = scalar_lea.vmem %s0, %s230
      %p232 = pneg %p52
      %p233 = pneg %p49
      %p234 = pneg %p73
      %p235 = pneg %p70
      %p236 = pneg %p94
      %p237 = pneg %p91
      %p238 = pneg %p122
      %p239 = pneg %p119
      %s240 = smul.u32 64, %s22
      %p241 = scmp.lt.s32.totalorder %s21, 1
      %s242 = scalar_select %p241, %s21, 1
      %p243 = scmp.lt.s32.totalorder %s240, 127
      %s244 = scalar_select %p243, %s240, 127
      %s245 = smul.addr %s242, 128
      %s246 = sadd.s32 %s244, %s245
      %s247 = smul.addr %s246, 4
      %s248 = scalar_lea.vmem %s3, %s247
      %p249 = pneg %p150
      %p250 = pneg %p147
      %s251 = smul.u32 64, %s22
      %p252 = scmp.lt.s32.totalorder %s21, 1
      %s253 = scalar_select %p252, %s21, 1
      %p254 = scmp.lt.s32.totalorder %s251, 127
      %s255 = scalar_select %p254, %s251, 127
      %s256 = smul.addr %s253, 128
      %s257 = sadd.s32 %s255, %s256
      %s258 = smul.addr %s257, 4
      %s259 = scalar_lea.vmem %s4, %s258
      %p260 = pneg %p178
      %p261 = pneg %p175
      %s262 = smul.u32 64, %s22
      %p263 = scmp.lt.s32.totalorder %s21, 1
      %s264 = scalar_select %p263, %s21, 1
      %p265 = scmp.lt.s32.totalorder %s262, 127
      %s266 = scalar_select %p265, %s262, 127
      %s267 = smul.addr %s264, 128
      %s268 = sadd.s32 %s266, %s267
      %s269 = smul.addr %s268, 4
      %s270 = scalar_lea.vmem %s5, %s269
      %s271 = smul.u32 64, %s22
      %p272 = scmp.lt.s32.totalorder %s21, 1
      %s273 = scalar_select %p272, %s21, 1
      %p274 = scmp.lt.s32.totalorder %s271, 127
      %s275 = scalar_select %p274, %s271, 127
      %s276 = smul.addr %s273, 128
      %s277 = sadd.s32 %s275, %s276
      %s278 = smul.addr %s277, 4
      %s279 = scalar_lea.vmem %s0, %s278
      %s280 = smul.u32 64, %s22
      %s281 = smul.u32 64, %s22
      %p282 = scmp.lt.s32.totalorder %s21, 1
      %s283 = scalar_select %p282, %s21, 1
      %p284 = scmp.lt.s32.totalorder %s281, 127
      %s285 = scalar_select %p284, %s281, 127
      %s286 = smul.addr %s283, 128
      %s287 = sadd.s32 %s285, %s286
      %s288 = smul.addr %s287, 4
      %s289 = scalar_lea.vmem %s3, %s288
      %s290 = smul.u32 64, %s22
      %s291 = smul.u32 64, %s22
      %p292 = scmp.lt.s32.totalorder %s21, 1
      %s293 = scalar_select %p292, %s21, 1
      %p294 = scmp.lt.s32.totalorder %s291, 127
      %s295 = scalar_select %p294, %s291, 127
      %s296 = smul.addr %s293, 128
      %s297 = sadd.s32 %s295, %s296
      %s298 = smul.addr %s297, 4
      %s299 = scalar_lea.vmem %s4, %s298
      %s300 = smul.u32 64, %s22
      %s301 = smul.u32 64, %s22
      %p302 = scmp.lt.s32.totalorder %s21, 1
      %s303 = scalar_select %p302, %s21, 1
      %p304 = scmp.lt.s32.totalorder %s301, 127
      %s305 = scalar_select %p304, %s301, 127
      %s306 = smul.addr %s303, 128
      %s307 = sadd.s32 %s305, %s306
      %s308 = smul.addr %s307, 4
      %s309 = scalar_lea.vmem %s5, %s308
      %s310 = smul.u32 64, %s22
      %v312 = vld [vmem:[%s279] sm:$0xf]
      %v313 = vld [vmem:[%s279 + $0x4] sm:$0xf]
      %v314 = vld [vmem:[%s279 + $0x8] sm:$0xf]
      %v315 = vld [vmem:[%s279 + $0xc] sm:$0xf]
      %v316 = vld [vmem:[%s279 + $0x10] sm:$0xf]
      %v317 = vld [vmem:[%s279 + $0x14] sm:$0xf]
      %v318 = vld [vmem:[%s279 + $0x18] sm:$0xf]
      %v319 = vld [vmem:[%s279 + $0x1c] sm:$0xf]
      %v320 = vld [vmem:[%s279 + $0x20] sm:$0xf]
      %v321 = vld [vmem:[%s279 + $0x24] sm:$0xf]
      %v322 = vld [vmem:[%s279 + $0x28] sm:$0xf]
      %v323 = vld [vmem:[%s279 + $0x2c] sm:$0xf]
      %v324 = vld [vmem:[%s279 + $0x30] sm:$0xf]
      %v325 = vld [vmem:[%s279 + $0x34] sm:$0xf]
      %v326 = vld [vmem:[%s279 + $0x38] sm:$0xf]
      %v327 = vld [vmem:[%s279 + $0x3c] sm:$0xf]
      %v328 = vld [vmem:[%s279 + $0x40] sm:$0xf]
      %v329 = vld [vmem:[%s279 + $0x44] sm:$0xf]
      %v330 = vld [vmem:[%s279 + $0x48] sm:$0xf]
      %v331 = vld [vmem:[%s279 + $0x4c] sm:$0xf]
      %v332 = vld [vmem:[%s279 + $0x50] sm:$0xf]
      %v333 = vld [vmem:[%s279 + $0x54] sm:$0xf]
      %v334 = vld [vmem:[%s279 + $0x58] sm:$0xf]
      %v335 = vld [vmem:[%s279 + $0x5c] sm:$0xf]
      %v336 = vld [vmem:[%s279 + $0x60] sm:$0xf]
      %v337 = vld [vmem:[%s279 + $0x64] sm:$0xf]
      %v338 = vld [vmem:[%s279 + $0x68] sm:$0xf]
      %v339 = vld [vmem:[%s279 + $0x6c] sm:$0xf]
      %v340 = vld [vmem:[%s279 + $0x70] sm:$0xf]
      %v341 = vld [vmem:[%s279 + $0x74] sm:$0xf]
      %v342 = vld [vmem:[%s279 + $0x78] sm:$0xf]
      %v343 = vld [vmem:[%s279 + $0x7c] sm:$0xf]
      %v344 = vld [vmem:[%s279 + $0x80] sm:$0xf]
      %v345 = vld [vmem:[%s279 + $0x84] sm:$0xf]
      %v346 = vld [vmem:[%s279 + $0x88] sm:$0xf]
      %v347 = vld [vmem:[%s279 + $0x8c] sm:$0xf]
      %v348 = vld [vmem:[%s279 + $0x90] sm:$0xf]
      %v349 = vld [vmem:[%s279 + $0x94] sm:$0xf]
      %v350 = vld [vmem:[%s279 + $0x98] sm:$0xf]
      %v351 = vld [vmem:[%s279 + $0x9c] sm:$0xf]
      %v352 = vld [vmem:[%s279 + $0xa0] sm:$0xf]
      %v353 = vld [vmem:[%s279 + $0xa4] sm:$0xf]
      %v354 = vld [vmem:[%s279 + $0xa8] sm:$0xf]
      %v355 = vld [vmem:[%s279 + $0xac] sm:$0xf]
      %v356 = vld [vmem:[%s279 + $0xb0] sm:$0xf]
      %v357 = vld [vmem:[%s279 + $0xb4] sm:$0xf]
      %v358 = vld [vmem:[%s279 + $0xb8] sm:$0xf]
      %v359 = vld [vmem:[%s279 + $0xbc] sm:$0xf]
      %v360 = vld [vmem:[%s279 + $0xc0] sm:$0xf]
      %v361 = vld [vmem:[%s279 + $0xc4] sm:$0xf]
      %v362 = vld [vmem:[%s279 + $0xc8] sm:$0xf]
      %v363 = vld [vmem:[%s279 + $0xcc] sm:$0xf]
      %v364 = vld [vmem:[%s279 + $0xd0] sm:$0xf]
      %v365 = vld [vmem:[%s279 + $0xd4] sm:$0xf]
      %v366 = vld [vmem:[%s279 + $0xd8] sm:$0xf]
      %v367 = vld [vmem:[%s279 + $0xdc] sm:$0xf]
      %v368 = vld [vmem:[%s279 + $0xe0] sm:$0xf]
      %v369 = vld [vmem:[%s279 + $0xe4] sm:$0xf]
      %v370 = vld [vmem:[%s279 + $0xe8] sm:$0xf]
      %v371 = vld [vmem:[%s279 + $0xec] sm:$0xf]
      %v372 = vld [vmem:[%s279 + $0xf0] sm:$0xf]
      %v373 = vld [vmem:[%s279 + $0xf4] sm:$0xf]
      %v374 = vld [vmem:[%s279 + $0xf8] sm:$0xf]
      %v375 = vld [vmem:[%s279 + $0xfc] sm:$0xf]
      %v376 = vld [vmem:[%s1] sm:$0xf]
      %v377 = vld [vmem:[%s1 + $0x4] sm:$0xf]
      %v378 = vld [vmem:[%s2] sm:$0x1]
      %v380 = vlaneseq
      %v381 = vshrl.u32 %v380, 7
      %v382 = vsub.s32 0, %v381
      %v383 = vrot.slane %v378, %v382
      %v449 = vunpack.c.l.b16 %v312
      %v450 = vunpack.c.l.b16 %v313
      %v451 = vunpack.c.l.b16 %v314
      %v452 = vunpack.c.l.b16 %v315
      %v453 = vunpack.c.l.b16 %v316
      %v454 = vunpack.c.l.b16 %v317
      %v455 = vunpack.c.l.b16 %v318
      %v456 = vunpack.c.l.b16 %v319
      %v457 = vunpack.c.l.b16 %v320
      %v458 = vunpack.c.l.b16 %v321
      %v459 = vunpack.c.l.b16 %v322
      %v460 = vunpack.c.l.b16 %v323
      %v461 = vunpack.c.l.b16 %v324
      %v462 = vunpack.c.l.b16 %v325
      %v463 = vunpack.c.l.b16 %v326
      %v464 = vunpack.c.l.b16 %v327
      %v465 = vunpack.c.l.b16 %v328
      %v466 = vunpack.c.l.b16 %v329
      %v467 = vunpack.c.l.b16 %v330
      %v468 = vunpack.c.l.b16 %v331
      %v469 = vunpack.c.l.b16 %v332
      %v470 = vunpack.c.l.b16 %v333
      %v471 = vunpack.c.l.b16 %v334
      %v472 = vunpack.c.l.b16 %v335
      %v473 = vunpack.c.l.b16 %v336
      %v474 = vunpack.c.l.b16 %v337
      %v475 = vunpack.c.l.b16 %v338
      %v476 = vunpack.c.l.b16 %v339
      %v477 = vunpack.c.l.b16 %v340
      %v478 = vunpack.c.l.b16 %v341
      %v479 = vunpack.c.l.b16 %v342
      %v480 = vunpack.c.l.b16 %v343
      %v481 = vunpack.c.l.b16 %v344
      %v482 = vunpack.c.l.b16 %v345
      %v483 = vunpack.c.l.b16 %v346
      %v484 = vunpack.c.l.b16 %v347
      %v485 = vunpack.c.l.b16 %v348
      %v486 = vunpack.c.l.b16 %v349
      %v487 = vunpack.c.l.b16 %v350
      %v488 = vunpack.c.l.b16 %v351
      %v489 = vunpack.c.l.b16 %v352
      %v490 = vunpack.c.l.b16 %v353
      %v491 = vunpack.c.l.b16 %v354
      %v492 = vunpack.c.l.b16 %v355
      %v493 = vunpack.c.l.b16 %v356
      %v494 = vunpack.c.l.b16 %v357
      %v495 = vunpack.c.l.b16 %v358
      %v496 = vunpack.c.l.b16 %v359
      %v497 = vunpack.c.l.b16 %v360
      %v498 = vunpack.c.l.b16 %v361
      %v499 = vunpack.c.l.b16 %v362
      %v500 = vunpack.c.l.b16 %v363
      %v501 = vunpack.c.l.b16 %v364
      %v502 = vunpack.c.l.b16 %v365
      %v503 = vunpack.c.l.b16 %v366
      %v504 = vunpack.c.l.b16 %v367
      %v505 = vunpack.c.l.b16 %v368
      %v506 = vunpack.c.l.b16 %v369
      %v507 = vunpack.c.l.b16 %v370
      %v508 = vunpack.c.l.b16 %v371
      %v509 = vunpack.c.l.b16 %v372
      %v510 = vunpack.c.l.b16 %v373
      %v511 = vunpack.c.l.b16 %v374
      %v512 = vunpack.c.l.b16 %v375
      %v513 = vpack.c.b16 %v450, %v449
      %v514 = vpack.c.b16 %v452, %v451
      %v515 = vpack.c.b16 %v454, %v453
      %v516 = vpack.c.b16 %v456, %v455
      %v517 = vpack.c.b16 %v458, %v457
      %v518 = vpack.c.b16 %v460, %v459
      %v519 = vpack.c.b16 %v462, %v461
      %v520 = vpack.c.b16 %v464, %v463
      %v521 = vpack.c.b16 %v466, %v465
      %v522 = vpack.c.b16 %v468, %v467
      %v523 = vpack.c.b16 %v470, %v469
      %v524 = vpack.c.b16 %v472, %v471
      %v525 = vpack.c.b16 %v474, %v473
      %v526 = vpack.c.b16 %v476, %v475
      %v527 = vpack.c.b16 %v478, %v477
      %v528 = vpack.c.b16 %v480, %v479
      %v529 = vpack.c.b16 %v482, %v481
      %v530 = vpack.c.b16 %v484, %v483
      %v531 = vpack.c.b16 %v486, %v485
      %v532 = vpack.c.b16 %v488, %v487
      %v533 = vpack.c.b16 %v490, %v489
      %v534 = vpack.c.b16 %v492, %v491
      %v535 = vpack.c.b16 %v494, %v493
      %v536 = vpack.c.b16 %v496, %v495
      %v537 = vpack.c.b16 %v498, %v497
      %v538 = vpack.c.b16 %v500, %v499
      %v539 = vpack.c.b16 %v502, %v501
      %v540 = vpack.c.b16 %v504, %v503
      %v541 = vpack.c.b16 %v506, %v505
      %v542 = vpack.c.b16 %v508, %v507
      %v543 = vpack.c.b16 %v510, %v509
      %v544 = vpack.c.b16 %v512, %v511
      %v547 = vunpack.c.l.b16 %v376
      %v548 = vunpack.c.l.b16 %v377
      %v549 = vpack.c.b16 %v548, %v547
      %vm551 = vcmask 130048
      %v553 = vsel %vm551, %v513, 0
      %v556 = vsel %vm551, %v514, 0
      %v559 = vsel %vm551, %v515, 0
      %v562 = vsel %vm551, %v516, 0
      %v565 = vsel %vm551, %v517, 0
      %v568 = vsel %vm551, %v518, 0
      %v571 = vsel %vm551, %v519, 0
      %v574 = vsel %vm551, %v520, 0
      %v577 = vsel %vm551, %v521, 0
      %v580 = vsel %vm551, %v522, 0
      %v583 = vsel %vm551, %v523, 0
      %v586 = vsel %vm551, %v524, 0
      %v589 = vsel %vm551, %v525, 0
      %v592 = vsel %vm551, %v526, 0
      %v595 = vsel %vm551, %v527, 0
      %v598 = vsel %vm551, %v528, 0
      %v601 = vsel %vm551, %v529, 0
      %v604 = vsel %vm551, %v530, 0
      %v607 = vsel %vm551, %v531, 0
      %v610 = vsel %vm551, %v532, 0
      %v613 = vsel %vm551, %v533, 0
      %v616 = vsel %vm551, %v534, 0
      %v619 = vsel %vm551, %v535, 0
      %v622 = vsel %vm551, %v536, 0
      %v625 = vsel %vm551, %v537, 0
      %v628 = vsel %vm551, %v538, 0
      %v631 = vsel %vm551, %v539, 0
      %v634 = vsel %vm551, %v540, 0
      %v637 = vsel %vm551, %v541, 0
      %v640 = vsel %vm551, %v542, 0
      %v643 = vsel %vm551, %v543, 0
      %v646 = vsel %vm551, %v544, 0
      %648 = vmatprep.subr.bf16.mxu0 0
      %649 = vmatpush1.bf16.msra.mxu0 %v549
      %650 = vmatprep.subr.bf16.mxu0 0
      %651 = vmatpush1.bf16.msra.mxu0 0
      %652 = vmatprep.subr.bf16.mxu0 0
      %653 = vmatpush1.bf16.msra.mxu0 0
      %654 = vmatprep.subr.bf16.mxu0 0
      %655 = vmatpush1.bf16.msra.mxu0 0
      %656 = vmatprep.subr.bf16.mxu0 0
      %657 = vmatpush1.bf16.msra.mxu0 0
      %658 = vmatprep.subr.bf16.mxu0 0
      %659 = vmatpush1.bf16.msra.mxu0 0
      %660 = vmatprep.subr.bf16.mxu0 0
      %661 = vmatpush1.bf16.msra.mxu0 0
      %662 = vmatprep.subr.bf16.mxu0 0
      %663 = vmatpush1.bf16.msra.mxu0 0
      %664 = vmatprep.subr.bf16.mxu0 0
      %665 = vmatpush1.bf16.msra.mxu0 0
      %666 = vmatprep.subr.bf16.mxu0 0
      %667 = vmatpush1.bf16.msra.mxu0 0
      %668 = vmatprep.subr.bf16.mxu0 0
      %669 = vmatpush1.bf16.msra.mxu0 0
      %670 = vmatprep.subr.bf16.mxu0 0
      %671 = vmatpush1.bf16.msra.mxu0 0
      %672 = vmatprep.subr.bf16.mxu0 0
      %673 = vmatpush1.bf16.msra.mxu0 0
      %674 = vmatprep.subr.bf16.mxu0 0
      %675 = vmatpush1.bf16.msra.mxu0 0
      %676 = vmatprep.subr.bf16.mxu0 0
      %677 = vmatpush1.bf16.msra.mxu0 0
      %678 = vmatprep.subr.bf16.mxu0 0
      %679 = vmatpush1.bf16.msra.mxu0 0
      %680 = vmatprep.mubr.bf16.mxu0 0
      %681 = vmatmul.mubr.bf16.gmra.mrb[0].mxu0 %v553
      %v682 = vpop.f32.mrb[0].mxu0
      %v683 = vadd.f32 %v383, %v682
      %v684 = vpop.f32.mrb[0].mxu0
      %v685 = vpop.f32.mrb[0].mxu0
      %v686 = vadd.f32 %v383, %v685
      %v687 = vpop.f32.mrb[0].mxu0
      %688 = vmatprep.mubr.bf16.mxu0 0
      %689 = vmatmul.mubr.bf16.gmra.mrb[0].mxu0 %v556
      %v690 = vpop.f32.mrb[0].mxu0
      %v691 = vadd.f32 %v383, %v690
      %v692 = vpop.f32.mrb[0].mxu0
      %v693 = vpop.f32.mrb[0].mxu0
      %v694 = vadd.f32 %v383, %v693
      %v695 = vpop.f32.mrb[0].mxu0
      %696 = vmatprep.mubr.bf16.mxu0 0
      %697 = vmatmul.mubr.bf16.gmra.mrb[0].mxu0 %v559
      %v698 = vpop.f32.mrb[0].mxu0
      %v699 = vadd.f32 %v383, %v698
      %v700 = vpop.f32.mrb[0].mxu0
      %v701 = vpop.f32.mrb[0].mxu0
      %v702 = vadd.f32 %v383, %v701
      %v703 = vpop.f32.mrb[0].mxu0
      %704 = vmatprep.mubr.bf16.mxu0 0
      %705 = vmatmul.mubr.bf16.gmra.mrb[0].mxu0 %v562
      %v706 = vpop.f32.mrb[0].mxu0
      %v707 = vadd.f32 %v383, %v706
      %v708 = vpop.f32.mrb[0].mxu0
      %v709 = vpop.f32.mrb[0].mxu0
      %v710 = vadd.f32 %v383, %v709
      %v711 = vpop.f32.mrb[0].mxu0
      %712 = vmatprep.mubr.bf16.mxu0 0
      %713 = vmatmul.mubr.bf16.gmra.mrb[0].mxu0 %v565
      %v714 = vpop.f32.mrb[0].mxu0
      %v715 = vadd.f32 %v383, %v714
      %v716 = vpop.f32.mrb[0].mxu0
      %v717 = vpop.f32.mrb[0].mxu0
      %v718 = vadd.f32 %v383, %v717
      %v719 = vpop.f32.mrb[0].mxu0
      %720 = vmatprep.mubr.bf16.mxu0 0
      %721 = vmatmul.mubr.bf16.gmra.mrb[0].mxu0 %v568
      %v722 = vpop.f32.mrb[0].mxu0
      %v723 = vadd.f32 %v383, %v722
      %v724 = vpop.f32.mrb[0].mxu0
      %v725 = vpop.f32.mrb[0].mxu0
      %v726 = vadd.f32 %v383, %v725
      %v727 = vpop.f32.mrb[0].mxu0
      %728 = vmatprep.mubr.bf16.mxu0 0
      %729 = vmatmul.mubr.bf16.gmra.mrb[0].mxu0 %v571
      %v730 = vpop.f32.mrb[0].mxu0
      %v731 = vadd.f32 %v383, %v730
      %v732 = vpop.f32.mrb[0].mxu0
      %v733 = vpop.f32.mrb[0].mxu0
      %v734 = vadd.f32 %v383, %v733
      %v735 = vpop.f32.mrb[0].mxu0
      %736 = vmatprep.mubr.bf16.mxu0 0
      %737 = vmatmul.mubr.bf16.gmra.mrb[0].mxu0 %v574
      %v738 = vpop.f32.mrb[0].mxu0
      %v739 = vadd.f32 %v383, %v738
      %v740 = vpop.f32.mrb[0].mxu0
      %v741 = vpop.f32.mrb[0].mxu0
      %v742 = vadd.f32 %v383, %v741
      %v743 = vpop.f32.mrb[0].mxu0
      %744 = vmatprep.mubr.bf16.mxu0 0
      %745 = vmatmul.mubr.bf16.gmra.mrb[0].mxu0 %v577
      %v746 = vpop.f32.mrb[0].mxu0
      %v747 = vadd.f32 %v383, %v746
      %v748 = vpop.f32.mrb[0].mxu0
      %v749 = vpop.f32.mrb[0].mxu0
      %v750 = vadd.f32 %v383, %v749
      %v751 = vpop.f32.mrb[0].mxu0
      %752 = vmatprep.mubr.bf16.mxu0 0
      %753 = vmatmul.mubr.bf16.gmra.mrb[0].mxu0 %v580
      %v754 = vpop.f32.mrb[0].mxu0
      %v755 = vadd.f32 %v383, %v754
      %v756 = vpop.f32.mrb[0].mxu0
      %v757 = vpop.f32.mrb[0].mxu0
      %v758 = vadd.f32 %v383, %v757
      %v759 = vpop.f32.mrb[0].mxu0
      %760 = vmatprep.mubr.bf16.mxu0 0
      %761 = vmatmul.mubr.bf16.gmra.mrb[0].mxu0 %v583
      %v762 = vpop.f32.mrb[0].mxu0
      %v763 = vadd.f32 %v383, %v762
      %v764 = vpop.f32.mrb[0].mxu0
      %v765 = vpop.f32.mrb[0].mxu0
      %v766 = vadd.f32 %v383, %v765
      %v767 = vpop.f32.mrb[0].mxu0
      %768 = vmatprep.mubr.bf16.mxu0 0
      %769 = vmatmul.mubr.bf16.gmra.mrb[0].mxu0 %v586
      %v770 = vpop.f32.mrb[0].mxu0
      %v771 = vadd.f32 %v383, %v770
      %v772 = vpop.f32.mrb[0].mxu0
      %v773 = vpop.f32.mrb[0].mxu0
      %v774 = vadd.f32 %v383, %v773
      %v775 = vpop.f32.mrb[0].mxu0
      %776 = vmatprep.mubr.bf16.mxu0 0
      %777 = vmatmul.mubr.bf16.gmra.mrb[0].mxu0 %v589
      %v778 = vpop.f32.mrb[0].mxu0
      %v779 = vadd.f32 %v383, %v778
      %v780 = vpop.f32.mrb[0].mxu0
      %v781 = vpop.f32.mrb[0].mxu0
      %v782 = vadd.f32 %v383, %v781
      %v783 = vpop.f32.mrb[0].mxu0
      %784 = vmatprep.mubr.bf16.mxu0 0
      %785 = vmatmul.mubr.bf16.gmra.mrb[0].mxu0 %v592
      %v786 = vpop.f32.mrb[0].mxu0
      %v787 = vadd.f32 %v383, %v786
      %v788 = vpop.f32.mrb[0].mxu0
      %v789 = vpop.f32.mrb[0].mxu0
      %v790 = vadd.f32 %v383, %v789
      %v791 = vpop.f32.mrb[0].mxu0
      %792 = vmatprep.mubr.bf16.mxu0 0
      %793 = vmatmul.mubr.bf16.gmra.mrb[0].mxu0 %v595
      %v794 = vpop.f32.mrb[0].mxu0
      %v795 = vadd.f32 %v383, %v794
      %v796 = vpop.f32.mrb[0].mxu0
      %v797 = vpop.f32.mrb[0].mxu0
      %v798 = vadd.f32 %v383, %v797
      %v799 = vpop.f32.mrb[0].mxu0
      %800 = vmatprep.mubr.bf16.mxu0 0
      %801 = vmatmul.mubr.bf16.gmra.mrb[0].mxu0 %v598
      %v802 = vpop.f32.mrb[0].mxu0
      %v803 = vadd.f32 %v383, %v802
      %v804 = vpop.f32.mrb[0].mxu0
      %v805 = vpop.f32.mrb[0].mxu0
      %v806 = vadd.f32 %v383, %v805
      %v807 = vpop.f32.mrb[0].mxu0
      %808 = vmatprep.mubr.bf16.mxu0 0
      %809 = vmatmul.mubr.bf16.gmra.mrb[0].mxu0 %v601
      %v810 = vpop.f32.mrb[0].mxu0
      %v811 = vadd.f32 %v383, %v810
      %v812 = vpop.f32.mrb[0].mxu0
      %v813 = vpop.f32.mrb[0].mxu0
      %v814 = vadd.f32 %v383, %v813
      %v815 = vpop.f32.mrb[0].mxu0
      %816 = vmatprep.mubr.bf16.mxu0 0
      %817 = vmatmul.mubr.bf16.gmra.mrb[0].mxu0 %v604
      %v818 = vpop.f32.mrb[0].mxu0
      %v819 = vadd.f32 %v383, %v818
      %v820 = vpop.f32.mrb[0].mxu0
      %v821 = vpop.f32.mrb[0].mxu0
      %v822 = vadd.f32 %v383, %v821
      %v823 = vpop.f32.mrb[0].mxu0
      %824 = vmatprep.mubr.bf16.mxu0 0
      %825 = vmatmul.mubr.bf16.gmra.mrb[0].mxu0 %v607
      %v826 = vpop.f32.mrb[0].mxu0
      %v827 = vadd.f32 %v383, %v826
      %v828 = vpop.f32.mrb[0].mxu0
      %v829 = vpop.f32.mrb[0].mxu0
      %v830 = vadd.f32 %v383, %v829
      %v831 = vpop.f32.mrb[0].mxu0
      %832 = vmatprep.mubr.bf16.mxu0 0
      %833 = vmatmul.mubr.bf16.gmra.mrb[0].mxu0 %v610
      %v834 = vpop.f32.mrb[0].mxu0
      %v835 = vadd.f32 %v383, %v834
      %v836 = vpop.f32.mrb[0].mxu0
      %v837 = vpop.f32.mrb[0].mxu0
      %v838 = vadd.f32 %v383, %v837
      %v839 = vpop.f32.mrb[0].mxu0
      %840 = vmatprep.mubr.bf16.mxu0 0
      %841 = vmatmul.mubr.bf16.gmra.mrb[0].mxu0 %v613
      %v842 = vpop.f32.mrb[0].mxu0
      %v843 = vadd.f32 %v383, %v842
      %v844 = vpop.f32.mrb[0].mxu0
      %v845 = vpop.f32.mrb[0].mxu0
      %v846 = vadd.f32 %v383, %v845
      %v847 = vpop.f32.mrb[0].mxu0
      %848 = vmatprep.mubr.bf16.mxu0 0
      %849 = vmatmul.mubr.bf16.gmra.mrb[0].mxu0 %v616
      %v850 = vpop.f32.mrb[0].mxu0
      %v851 = vadd.f32 %v383, %v850
      %v852 = vpop.f32.mrb[0].mxu0
      %v853 = vpop.f32.mrb[0].mxu0
      %v854 = vadd.f32 %v383, %v853
      %v855 = vpop.f32.mrb[0].mxu0
      %856 = vmatprep.mubr.bf16.mxu0 0
      %857 = vmatmul.mubr.bf16.gmra.mrb[0].mxu0 %v619
      %v858 = vpop.f32.mrb[0].mxu0
      %v859 = vadd.f32 %v383, %v858
      %v860 = vpop.f32.mrb[0].mxu0
      %v861 = vpop.f32.mrb[0].mxu0
      %v862 = vadd.f32 %v383, %v861
      %v863 = vpop.f32.mrb[0].mxu0
      %864 = vmatprep.mubr.bf16.mxu0 0
      %865 = vmatmul.mubr.bf16.gmra.mrb[0].mxu0 %v622
      %v866 = vpop.f32.mrb[0].mxu0
      %v867 = vadd.f32 %v383, %v866
      %v868 = vpop.f32.mrb[0].mxu0
      %v869 = vpop.f32.mrb[0].mxu0
      %v870 = vadd.f32 %v383, %v869
      %v871 = vpop.f32.mrb[0].mxu0
      %872 = vmatprep.mubr.bf16.mxu0 0
      %873 = vmatmul.mubr.bf16.gmra.mrb[0].mxu0 %v625
      %v874 = vpop.f32.mrb[0].mxu0
      %v875 = vadd.f32 %v383, %v874
      %v876 = vpop.f32.mrb[0].mxu0
      %v877 = vpop.f32.mrb[0].mxu0
      %v878 = vadd.f32 %v383, %v877
      %v879 = vpop.f32.mrb[0].mxu0
      %880 = vmatprep.mubr.bf16.mxu0 0
      %881 = vmatmul.mubr.bf16.gmra.mrb[0].mxu0 %v628
      %v882 = vpop.f32.mrb[0].mxu0
      %v883 = vadd.f32 %v383, %v882
      %v884 = vpop.f32.mrb[0].mxu0
      %v885 = vpop.f32.mrb[0].mxu0
      %v886 = vadd.f32 %v383, %v885
      %v887 = vpop.f32.mrb[0].mxu0
      %888 = vmatprep.mubr.bf16.mxu0 0
      %889 = vmatmul.mubr.bf16.gmra.mrb[0].mxu0 %v631
      %v890 = vpop.f32.mrb[0].mxu0
      %v891 = vadd.f32 %v383, %v890
      %v892 = vpop.f32.mrb[0].mxu0
      %v893 = vpop.f32.mrb[0].mxu0
      %v894 = vadd.f32 %v383, %v893
      %v895 = vpop.f32.mrb[0].mxu0
      %896 = vmatprep.mubr.bf16.mxu0 0
      %897 = vmatmul.mubr.bf16.gmra.mrb[0].mxu0 %v634
      %v898 = vpop.f32.mrb[0].mxu0
      %v899 = vadd.f32 %v383, %v898
      %v900 = vpop.f32.mrb[0].mxu0
      %v901 = vpop.f32.mrb[0].mxu0
      %v902 = vadd.f32 %v383, %v901
      %v903 = vpop.f32.mrb[0].mxu0
      %904 = vmatprep.mubr.bf16.mxu0 0
      %905 = vmatmul.mubr.bf16.gmra.mrb[0].mxu0 %v637
      %v906 = vpop.f32.mrb[0].mxu0
      %v907 = vadd.f32 %v383, %v906
      %v908 = vpop.f32.mrb[0].mxu0
      %v909 = vpop.f32.mrb[0].mxu0
      %v910 = vadd.f32 %v383, %v909
      %v911 = vpop.f32.mrb[0].mxu0
      %912 = vmatprep.mubr.bf16.mxu0 0
      %913 = vmatmul.mubr.bf16.gmra.mrb[0].mxu0 %v640
      %v914 = vpop.f32.mrb[0].mxu0
      %v915 = vadd.f32 %v383, %v914
      %v916 = vpop.f32.mrb[0].mxu0
      %v917 = vpop.f32.mrb[0].mxu0
      %v918 = vadd.f32 %v383, %v917
      %v919 = vpop.f32.mrb[0].mxu0
      %920 = vmatprep.mubr.bf16.mxu0 0
      %921 = vmatmul.mubr.bf16.gmra.mrb[0].mxu0 %v643
      %v922 = vpop.f32.mrb[0].mxu0
      %v923 = vadd.f32 %v383, %v922
      %v924 = vpop.f32.mrb[0].mxu0
      %v925 = vpop.f32.mrb[0].mxu0
      %v926 = vadd.f32 %v383, %v925
      %v927 = vpop.f32.mrb[0].mxu0
      %928 = vmatprep.mubr.bf16.mxu0 0
      %929 = vmatmul.mubr.bf16.gmra.mrb[0].mxu0 %v646
      %v930 = vpop.f32.mrb[0].mxu0
      %v931 = vadd.f32 %v383, %v930
      %v932 = vpop.f32.mrb[0].mxu0
      %v933 = vpop.f32.mrb[0].mxu0
      %v934 = vadd.f32 %v383, %v933
      %v935 = vpop.f32.mrb[0].mxu0
      %936 = vdwg.mxu0
      %v937 = vpack.c.bf16 %v686, %v683
      %v938 = vpack.c.bf16 %v694, %v691
      %v939 = vpack.c.bf16 %v702, %v699
      %v940 = vpack.c.bf16 %v710, %v707
      %v941 = vpack.c.bf16 %v718, %v715
      %v942 = vpack.c.bf16 %v726, %v723
      %v943 = vpack.c.bf16 %v734, %v731
      %v944 = vpack.c.bf16 %v742, %v739
      %v945 = vpack.c.bf16 %v750, %v747
      %v946 = vpack.c.bf16 %v758, %v755
      %v947 = vpack.c.bf16 %v766, %v763
      %v948 = vpack.c.bf16 %v774, %v771
      %v949 = vpack.c.bf16 %v782, %v779
      %v950 = vpack.c.bf16 %v790, %v787
      %v951 = vpack.c.bf16 %v798, %v795
      %v952 = vpack.c.bf16 %v806, %v803
      %v953 = vpack.c.bf16 %v814, %v811
      %v954 = vpack.c.bf16 %v822, %v819
      %v955 = vpack.c.bf16 %v830, %v827
      %v956 = vpack.c.bf16 %v838, %v835
      %v957 = vpack.c.bf16 %v846, %v843
      %v958 = vpack.c.bf16 %v854, %v851
      %v959 = vpack.c.bf16 %v862, %v859
      %v960 = vpack.c.bf16 %v870, %v867
      %v961 = vpack.c.bf16 %v878, %v875
      %v962 = vpack.c.bf16 %v886, %v883
      %v963 = vpack.c.bf16 %v894, %v891
      %v964 = vpack.c.bf16 %v902, %v899
      %v965 = vpack.c.bf16 %v910, %v907
      %v966 = vpack.c.bf16 %v918, %v915
      %v967 = vpack.c.bf16 %v926, %v923
      %v968 = vpack.c.bf16 %v934, %v931
      %v1001 = vunpack.c.l.b16 %v937
      %v1002 = vunpack.c.h.b16 %v937
      %v1003 = vunpack.c.l.b16 %v938
      %v1004 = vunpack.c.h.b16 %v938
      %v1005 = vunpack.c.l.b16 %v939
      %v1006 = vunpack.c.h.b16 %v939
      %v1007 = vunpack.c.l.b16 %v940
      %v1008 = vunpack.c.h.b16 %v940
      %v1009 = vunpack.c.l.b16 %v941
      %v1010 = vunpack.c.h.b16 %v941
      %v1011 = vunpack.c.l.b16 %v942
      %v1012 = vunpack.c.h.b16 %v942
      %v1013 = vunpack.c.l.b16 %v943
      %v1014 = vunpack.c.h.b16 %v943
      %v1015 = vunpack.c.l.b16 %v944
      %v1016 = vunpack.c.h.b16 %v944
      %v1017 = vunpack.c.l.b16 %v945
      %v1018 = vunpack.c.h.b16 %v945
      %v1019 = vunpack.c.l.b16 %v946
      %v1020 = vunpack.c.h.b16 %v946
      %v1021 = vunpack.c.l.b16 %v947
      %v1022 = vunpack.c.h.b16 %v947
      %v1023 = vunpack.c.l.b16 %v948
      %v1024 = vunpack.c.h.b16 %v948
      %v1025 = vunpack.c.l.b16 %v949
      %v1026 = vunpack.c.h.b16 %v949
      %v1027 = vunpack.c.l.b16 %v950
      %v1028 = vunpack.c.h.b16 %v950
      %v1029 = vunpack.c.l.b16 %v951
      %v1030 = vunpack.c.h.b16 %v951
      %v1031 = vunpack.c.l.b16 %v952
      %v1032 = vunpack.c.h.b16 %v952
      %v1033 = vunpack.c.l.b16 %v953
      %v1034 = vunpack.c.h.b16 %v953
      %v1035 = vunpack.c.l.b16 %v954
      %v1036 = vunpack.c.h.b16 %v954
      %v1037 = vunpack.c.l.b16 %v955
      %v1038 = vunpack.c.h.b16 %v955
      %v1039 = vunpack.c.l.b16 %v956
      %v1040 = vunpack.c.h.b16 %v956
      %v1041 = vunpack.c.l.b16 %v957
      %v1042 = vunpack.c.h.b16 %v957
      %v1043 = vunpack.c.l.b16 %v958
      %v1044 = vunpack.c.h.b16 %v958
      %v1045 = vunpack.c.l.b16 %v959
      %v1046 = vunpack.c.h.b16 %v959
      %v1047 = vunpack.c.l.b16 %v960
      %v1048 = vunpack.c.h.b16 %v960
      %v1049 = vunpack.c.l.b16 %v961
      %v1050 = vunpack.c.h.b16 %v961
      %v1051 = vunpack.c.l.b16 %v962
      %v1052 = vunpack.c.h.b16 %v962
      %v1053 = vunpack.c.l.b16 %v963
      %v1054 = vunpack.c.h.b16 %v963
      %v1055 = vunpack.c.l.b16 %v964
      %v1056 = vunpack.c.h.b16 %v964
      %v1057 = vunpack.c.l.b16 %v965
      %v1058 = vunpack.c.h.b16 %v965
      %v1059 = vunpack.c.l.b16 %v966
      %v1060 = vunpack.c.h.b16 %v966
      %v1061 = vunpack.c.l.b16 %v967
      %v1062 = vunpack.c.h.b16 %v967
      %v1063 = vunpack.c.l.b16 %v968
      %v1064 = vunpack.c.h.b16 %v968
      %v1065 = vpack.c.b16 %v1001, %v1001
      %v1066 = vpack.c.b16 %v1002, %v1002
      %v1067 = vpack.c.b16 %v1003, %v1003
      %v1068 = vpack.c.b16 %v1004, %v1004
      %v1069 = vpack.c.b16 %v1005, %v1005
      %v1070 = vpack.c.b16 %v1006, %v1006
      %v1071 = vpack.c.b16 %v1007, %v1007
      %v1072 = vpack.c.b16 %v1008, %v1008
      %v1073 = vpack.c.b16 %v1009, %v1009
      %v1074 = vpack.c.b16 %v1010, %v1010
      %v1075 = vpack.c.b16 %v1011, %v1011
      %v1076 = vpack.c.b16 %v1012, %v1012
      %v1077 = vpack.c.b16 %v1013, %v1013
      %v1078 = vpack.c.b16 %v1014, %v1014
      %v1079 = vpack.c.b16 %v1015, %v1015
      %v1080 = vpack.c.b16 %v1016, %v1016
      %v1081 = vpack.c.b16 %v1017, %v1017
      %v1082 = vpack.c.b16 %v1018, %v1018
      %v1083 = vpack.c.b16 %v1019, %v1019
      %v1084 = vpack.c.b16 %v1020, %v1020
      %v1085 = vpack.c.b16 %v1021, %v1021
      %v1086 = vpack.c.b16 %v1022, %v1022
      %v1087 = vpack.c.b16 %v1023, %v1023
      %v1088 = vpack.c.b16 %v1024, %v1024
      %v1089 = vpack.c.b16 %v1025, %v1025
      %v1090 = vpack.c.b16 %v1026, %v1026
      %v1091 = vpack.c.b16 %v1027, %v1027
      %v1092 = vpack.c.b16 %v1028, %v1028
      %v1093 = vpack.c.b16 %v1029, %v1029
      %v1094 = vpack.c.b16 %v1030, %v1030
      %v1095 = vpack.c.b16 %v1031, %v1031
      %v1096 = vpack.c.b16 %v1032, %v1032
      %v1097 = vpack.c.b16 %v1033, %v1033
      %v1098 = vpack.c.b16 %v1034, %v1034
      %v1099 = vpack.c.b16 %v1035, %v1035
      %v1100 = vpack.c.b16 %v1036, %v1036
      %v1101 = vpack.c.b16 %v1037, %v1037
      %v1102 = vpack.c.b16 %v1038, %v1038
      %v1103 = vpack.c.b16 %v1039, %v1039
      %v1104 = vpack.c.b16 %v1040, %v1040
      %v1105 = vpack.c.b16 %v1041, %v1041
      %v1106 = vpack.c.b16 %v1042, %v1042
      %v1107 = vpack.c.b16 %v1043, %v1043
      %v1108 = vpack.c.b16 %v1044, %v1044
      %v1109 = vpack.c.b16 %v1045, %v1045
      %v1110 = vpack.c.b16 %v1046, %v1046
      %v1111 = vpack.c.b16 %v1047, %v1047
      %v1112 = vpack.c.b16 %v1048, %v1048
      %v1113 = vpack.c.b16 %v1049, %v1049
      %v1114 = vpack.c.b16 %v1050, %v1050
      %v1115 = vpack.c.b16 %v1051, %v1051
      %v1116 = vpack.c.b16 %v1052, %v1052
      %v1117 = vpack.c.b16 %v1053, %v1053
      %v1118 = vpack.c.b16 %v1054, %v1054
      %v1119 = vpack.c.b16 %v1055, %v1055
      %v1120 = vpack.c.b16 %v1056, %v1056
      %v1121 = vpack.c.b16 %v1057, %v1057
      %v1122 = vpack.c.b16 %v1058, %v1058
      %v1123 = vpack.c.b16 %v1059, %v1059
      %v1124 = vpack.c.b16 %v1060, %v1060
      %v1125 = vpack.c.b16 %v1061, %v1061
      %v1126 = vpack.c.b16 %v1062, %v1062
      %v1127 = vpack.c.b16 %v1063, %v1063
      %v1128 = vpack.c.b16 %v1064, %v1064
      %vm1193 = vcmask 125952
      %1194 = vst.msk [vmem:[%s289] sm:$0xf] %vm1193, %v1065
      %1195 = vst.msk [vmem:[%s289 + $0x4] sm:$0xf] %vm1193, %v1066
      %1196 = vst.msk [vmem:[%s289 + $0x8] sm:$0xf] %vm1193, %v1067
      %1197 = vst.msk [vmem:[%s289 + $0xc] sm:$0xf] %vm1193, %v1068
      %1198 = vst.msk [vmem:[%s289 + $0x10] sm:$0xf] %vm1193, %v1069
      %1199 = vst.msk [vmem:[%s289 + $0x14] sm:$0xf] %vm1193, %v1070
      %1200 = vst.msk [vmem:[%s289 + $0x18] sm:$0xf] %vm1193, %v1071
      %1201 = vst.msk [vmem:[%s289 + $0x1c] sm:$0xf] %vm1193, %v1072
      %1202 = vst.msk [vmem:[%s289 + $0x20] sm:$0xf] %vm1193, %v1073
      %1203 = vst.msk [vmem:[%s289 + $0x24] sm:$0xf] %vm1193, %v1074
      %1204 = vst.msk [vmem:[%s289 + $0x28] sm:$0xf] %vm1193, %v1075
      %1205 = vst.msk [vmem:[%s289 + $0x2c] sm:$0xf] %vm1193, %v1076
      %1206 = vst.msk [vmem:[%s289 + $0x30] sm:$0xf] %vm1193, %v1077
      %1207 = vst.msk [vmem:[%s289 + $0x34] sm:$0xf] %vm1193, %v1078
      %1208 = vst.msk [vmem:[%s289 + $0x38] sm:$0xf] %vm1193, %v1079
      %1209 = vst.msk [vmem:[%s289 + $0x3c] sm:$0xf] %vm1193, %v1080
      %1210 = vst.msk [vmem:[%s289 + $0x40] sm:$0xf] %vm1193, %v1081
      %1211 = vst.msk [vmem:[%s289 + $0x44] sm:$0xf] %vm1193, %v1082
      %1212 = vst.msk [vmem:[%s289 + $0x48] sm:$0xf] %vm1193, %v1083
      %1213 = vst.msk [vmem:[%s289 + $0x4c] sm:$0xf] %vm1193, %v1084
      %1214 = vst.msk [vmem:[%s289 + $0x50] sm:$0xf] %vm1193, %v1085
      %1215 = vst.msk [vmem:[%s289 + $0x54] sm:$0xf] %vm1193, %v1086
      %1216 = vst.msk [vmem:[%s289 + $0x58] sm:$0xf] %vm1193, %v1087
      %1217 = vst.msk [vmem:[%s289 + $0x5c] sm:$0xf] %vm1193, %v1088
      %1218 = vst.msk [vmem:[%s289 + $0x60] sm:$0xf] %vm1193, %v1089
      %1219 = vst.msk [vmem:[%s289 + $0x64] sm:$0xf] %vm1193, %v1090
      %1220 = vst.msk [vmem:[%s289 + $0x68] sm:$0xf] %vm1193, %v1091
      %1221 = vst.msk [vmem:[%s289 + $0x6c] sm:$0xf] %vm1193, %v1092
      %1222 = vst.msk [vmem:[%s289 + $0x70] sm:$0xf] %vm1193, %v1093
      %1223 = vst.msk [vmem:[%s289 + $0x74] sm:$0xf] %vm1193, %v1094
      %1224 = vst.msk [vmem:[%s289 + $0x78] sm:$0xf] %vm1193, %v1095
      %1225 = vst.msk [vmem:[%s289 + $0x7c] sm:$0xf] %vm1193, %v1096
      %1226 = vst.msk [vmem:[%s289 + $0x80] sm:$0xf] %vm1193, %v1097
      %1227 = vst.msk [vmem:[%s289 + $0x84] sm:$0xf] %vm1193, %v1098
      %1228 = vst.msk [vmem:[%s289 + $0x88] sm:$0xf] %vm1193, %v1099
      %1229 = vst.msk [vmem:[%s289 + $0x8c] sm:$0xf] %vm1193, %v1100
      %1230 = vst.msk [vmem:[%s289 + $0x90] sm:$0xf] %vm1193, %v1101
      %1231 = vst.msk [vmem:[%s289 + $0x94] sm:$0xf] %vm1193, %v1102
      %1232 = vst.msk [vmem:[%s289 + $0x98] sm:$0xf] %vm1193, %v1103
      %1233 = vst.msk [vmem:[%s289 + $0x9c] sm:$0xf] %vm1193, %v1104
      %1234 = vst.msk [vmem:[%s289 + $0xa0] sm:$0xf] %vm1193, %v1105
      %1235 = vst.msk [vmem:[%s289 + $0xa4] sm:$0xf] %vm1193, %v1106
      %1236 = vst.msk [vmem:[%s289 + $0xa8] sm:$0xf] %vm1193, %v1107
      %1237 = vst.msk [vmem:[%s289 + $0xac] sm:$0xf] %vm1193, %v1108
      %1238 = vst.msk [vmem:[%s289 + $0xb0] sm:$0xf] %vm1193, %v1109
      %1239 = vst.msk [vmem:[%s289 + $0xb4] sm:$0xf] %vm1193, %v1110
      %1240 = vst.msk [vmem:[%s289 + $0xb8] sm:$0xf] %vm1193, %v1111
      %1241 = vst.msk [vmem:[%s289 + $0xbc] sm:$0xf] %vm1193, %v1112
      %1242 = vst.msk [vmem:[%s289 + $0xc0] sm:$0xf] %vm1193, %v1113
      %1243 = vst.msk [vmem:[%s289 + $0xc4] sm:$0xf] %vm1193, %v1114
      %1244 = vst.msk [vmem:[%s289 + $0xc8] sm:$0xf] %vm1193, %v1115
      %1245 = vst.msk [vmem:[%s289 + $0xcc] sm:$0xf] %vm1193, %v1116
      %1246 = vst.msk [vmem:[%s289 + $0xd0] sm:$0xf] %vm1193, %v1117
      %1247 = vst.msk [vmem:[%s289 + $0xd4] sm:$0xf] %vm1193, %v1118
      %1248 = vst.msk [vmem:[%s289 + $0xd8] sm:$0xf] %vm1193, %v1119
      %1249 = vst.msk [vmem:[%s289 + $0xdc] sm:$0xf] %vm1193, %v1120
      %1250 = vst.msk [vmem:[%s289 + $0xe0] sm:$0xf] %vm1193, %v1121
      %1251 = vst.msk [vmem:[%s289 + $0xe4] sm:$0xf] %vm1193, %v1122
      %1252 = vst.msk [vmem:[%s289 + $0xe8] sm:$0xf] %vm1193, %v1123
      %1253 = vst.msk [vmem:[%s289 + $0xec] sm:$0xf] %vm1193, %v1124
      %1254 = vst.msk [vmem:[%s289 + $0xf0] sm:$0xf] %vm1193, %v1125
      %1255 = vst.msk [vmem:[%s289 + $0xf4] sm:$0xf] %vm1193, %v1126
      %1256 = vst.msk [vmem:[%s289 + $0xf8] sm:$0xf] %vm1193, %v1127
      %1257 = vst.msk [vmem:[%s289 + $0xfc] sm:$0xf] %vm1193, %v1128
      %1258 = vrot.lane.b32.xlu0 %v1065, 112
      %v1259 = vpop.permute.xlu0 %1258
      %1260 = vrot.lane.b32.xlu0 %v1066, 112
      %v1261 = vpop.permute.xlu0 %1260
      %1262 = vrot.lane.b32.xlu0 %v1067, 112
      %v1263 = vpop.permute.xlu0 %1262
      %1264 = vrot.lane.b32.xlu0 %v1068, 112
      %v1265 = vpop.permute.xlu0 %1264
      %1266 = vrot.lane.b32.xlu0 %v1069, 112
      %v1267 = vpop.permute.xlu0 %1266
      %1268 = vrot.lane.b32.xlu0 %v1070, 112
      %v1269 = vpop.permute.xlu0 %1268
      %1270 = vrot.lane.b32.xlu0 %v1071, 112
      %v1271 = vpop.permute.xlu0 %1270
      %1272 = vrot.lane.b32.xlu0 %v1072, 112
      %v1273 = vpop.permute.xlu0 %1272
      %1274 = vrot.lane.b32.xlu0 %v1073, 112
      %v1275 = vpop.permute.xlu0 %1274
      %1276 = vrot.lane.b32.xlu0 %v1074, 112
      %v1277 = vpop.permute.xlu0 %1276
      %1278 = vrot.lane.b32.xlu0 %v1075, 112
      %v1279 = vpop.permute.xlu0 %1278
      %1280 = vrot.lane.b32.xlu0 %v1076, 112
      %v1281 = vpop.permute.xlu0 %1280
      %1282 = vrot.lane.b32.xlu0 %v1077, 112
      %v1283 = vpop.permute.xlu0 %1282
      %1284 = vrot.lane.b32.xlu0 %v1078, 112
      %v1285 = vpop.permute.xlu0 %1284
      %1286 = vrot.lane.b32.xlu0 %v1079, 112
      %v1287 = vpop.permute.xlu0 %1286
      %1288 = vrot.lane.b32.xlu0 %v1080, 112
      %v1289 = vpop.permute.xlu0 %1288
      %1290 = vrot.lane.b32.xlu0 %v1081, 112
      %v1291 = vpop.permute.xlu0 %1290
      %1292 = vrot.lane.b32.xlu0 %v1082, 112
      %v1293 = vpop.permute.xlu0 %1292
      %1294 = vrot.lane.b32.xlu0 %v1083, 112
      %v1295 = vpop.permute.xlu0 %1294
      %1296 = vrot.lane.b32.xlu0 %v1084, 112
      %v1297 = vpop.permute.xlu0 %1296
      %1298 = vrot.lane.b32.xlu0 %v1085, 112
      %v1299 = vpop.permute.xlu0 %1298
      %1300 = vrot.lane.b32.xlu0 %v1086, 112
      %v1301 = vpop.permute.xlu0 %1300
      %1302 = vrot.lane.b32.xlu0 %v1087, 112
      %v1303 = vpop.permute.xlu0 %1302
      %1304 = vrot.lane.b32.xlu0 %v1088, 112
      %v1305 = vpop.permute.xlu0 %1304
      %1306 = vrot.lane.b32.xlu0 %v1089, 112
      %v1307 = vpop.permute.xlu0 %1306
      %1308 = vrot.lane.b32.xlu0 %v1090, 112
      %v1309 = vpop.permute.xlu0 %1308
      %1310 = vrot.lane.b32.xlu0 %v1091, 112
      %v1311 = vpop.permute.xlu0 %1310
      %1312 = vrot.lane.b32.xlu0 %v1092, 112
      %v1313 = vpop.permute.xlu0 %1312
      %1314 = vrot.lane.b32.xlu0 %v1093, 112
      %v1315 = vpop.permute.xlu0 %1314
      %1316 = vrot.lane.b32.xlu0 %v1094, 112
      %v1317 = vpop.permute.xlu0 %1316
      %1318 = vrot.lane.b32.xlu0 %v1095, 112
      %v1319 = vpop.permute.xlu0 %1318
      %1320 = vrot.lane.b32.xlu0 %v1096, 112
      %v1321 = vpop.permute.xlu0 %1320
      %1322 = vrot.lane.b32.xlu0 %v1097, 112
      %v1323 = vpop.permute.xlu0 %1322
      %1324 = vrot.lane.b32.xlu0 %v1098, 112
      %v1325 = vpop.permute.xlu0 %1324
      %1326 = vrot.lane.b32.xlu0 %v1099, 112
      %v1327 = vpop.permute.xlu0 %1326
      %1328 = vrot.lane.b32.xlu0 %v1100, 112
      %v1329 = vpop.permute.xlu0 %1328
      %1330 = vrot.lane.b32.xlu0 %v1101, 112
      %v1331 = vpop.permute.xlu0 %1330
      %1332 = vrot.lane.b32.xlu0 %v1102, 112
      %v1333 = vpop.permute.xlu0 %1332
      %1334 = vrot.lane.b32.xlu0 %v1103, 112
      %v1335 = vpop.permute.xlu0 %1334
      %1336 = vrot.lane.b32.xlu0 %v1104, 112
      %v1337 = vpop.permute.xlu0 %1336
      %1338 = vrot.lane.b32.xlu0 %v1105, 112
      %v1339 = vpop.permute.xlu0 %1338
      %1340 = vrot.lane.b32.xlu0 %v1106, 112
      %v1341 = vpop.permute.xlu0 %1340
      %1342 = vrot.lane.b32.xlu0 %v1107, 112
      %v1343 = vpop.permute.xlu0 %1342
      %1344 = vrot.lane.b32.xlu0 %v1108, 112
      %v1345 = vpop.permute.xlu0 %1344
      %1346 = vrot.lane.b32.xlu0 %v1109, 112
      %v1347 = vpop.permute.xlu0 %1346
      %1348 = vrot.lane.b32.xlu0 %v1110, 112
      %v1349 = vpop.permute.xlu0 %1348
      %1350 = vrot.lane.b32.xlu0 %v1111, 112
      %v1351 = vpop.permute.xlu0 %1350
      %1352 = vrot.lane.b32.xlu0 %v1112, 112
      %v1353 = vpop.permute.xlu0 %1352
      %1354 = vrot.lane.b32.xlu0 %v1113, 112
      %v1355 = vpop.permute.xlu0 %1354
      %1356 = vrot.lane.b32.xlu0 %v1114, 112
      %v1357 = vpop.permute.xlu0 %1356
      %1358 = vrot.lane.b32.xlu0 %v1115, 112
      %v1359 = vpop.permute.xlu0 %1358
      %1360 = vrot.lane.b32.xlu0 %v1116, 112
      %v1361 = vpop.permute.xlu0 %1360
      %1362 = vrot.lane.b32.xlu0 %v1117, 112
      %v1363 = vpop.permute.xlu0 %1362
      %1364 = vrot.lane.b32.xlu0 %v1118, 112
      %v1365 = vpop.permute.xlu0 %1364
      %1366 = vrot.lane.b32.xlu0 %v1119, 112
      %v1367 = vpop.permute.xlu0 %1366
      %1368 = vrot.lane.b32.xlu0 %v1120, 112
      %v1369 = vpop.permute.xlu0 %1368
      %1370 = vrot.lane.b32.xlu0 %v1121, 112
      %v1371 = vpop.permute.xlu0 %1370
      %1372 = vrot.lane.b32.xlu0 %v1122, 112
      %v1373 = vpop.permute.xlu0 %1372
      %1374 = vrot.lane.b32.xlu0 %v1123, 112
      %v1375 = vpop.permute.xlu0 %1374
      %1376 = vrot.lane.b32.xlu0 %v1124, 112
      %v1377 = vpop.permute.xlu0 %1376
      %1378 = vrot.lane.b32.xlu0 %v1125, 112
      %v1379 = vpop.permute.xlu0 %1378
      %1380 = vrot.lane.b32.xlu0 %v1126, 112
      %v1381 = vpop.permute.xlu0 %1380
      %1382 = vrot.lane.b32.xlu0 %v1127, 112
      %v1383 = vpop.permute.xlu0 %1382
      %1384 = vrot.lane.b32.xlu0 %v1128, 112
      %v1385 = vpop.permute.xlu0 %1384
      %vm1450 = vcmask 11264
      %1451 = vst.msk [vmem:[%s299] sm:$0xf] %vm1450, %v1259
      %1452 = vst.msk [vmem:[%s299 + $0x4] sm:$0xf] %vm1450, %v1261
      %1453 = vst.msk [vmem:[%s299 + $0x8] sm:$0xf] %vm1450, %v1263
      %1454 = vst.msk [vmem:[%s299 + $0xc] sm:$0xf] %vm1450, %v1265
      %1455 = vst.msk [vmem:[%s299 + $0x10] sm:$0xf] %vm1450, %v1267
      %1456 = vst.msk [vmem:[%s299 + $0x14] sm:$0xf] %vm1450, %v1269
      %1457 = vst.msk [vmem:[%s299 + $0x18] sm:$0xf] %vm1450, %v1271
      %1458 = vst.msk [vmem:[%s299 + $0x1c] sm:$0xf] %vm1450, %v1273
      %1459 = vst.msk [vmem:[%s299 + $0x20] sm:$0xf] %vm1450, %v1275
      %1460 = vst.msk [vmem:[%s299 + $0x24] sm:$0xf] %vm1450, %v1277
      %1461 = vst.msk [vmem:[%s299 + $0x28] sm:$0xf] %vm1450, %v1279
      %1462 = vst.msk [vmem:[%s299 + $0x2c] sm:$0xf] %vm1450, %v1281
      %1463 = vst.msk [vmem:[%s299 + $0x30] sm:$0xf] %vm1450, %v1283
      %1464 = vst.msk [vmem:[%s299 + $0x34] sm:$0xf] %vm1450, %v1285
      %1465 = vst.msk [vmem:[%s299 + $0x38] sm:$0xf] %vm1450, %v1287
      %1466 = vst.msk [vmem:[%s299 + $0x3c] sm:$0xf] %vm1450, %v1289
      %1467 = vst.msk [vmem:[%s299 + $0x40] sm:$0xf] %vm1450, %v1291
      %1468 = vst.msk [vmem:[%s299 + $0x44] sm:$0xf] %vm1450, %v1293
      %1469 = vst.msk [vmem:[%s299 + $0x48] sm:$0xf] %vm1450, %v1295
      %1470 = vst.msk [vmem:[%s299 + $0x4c] sm:$0xf] %vm1450, %v1297
      %1471 = vst.msk [vmem:[%s299 + $0x50] sm:$0xf] %vm1450, %v1299
      %1472 = vst.msk [vmem:[%s299 + $0x54] sm:$0xf] %vm1450, %v1301
      %1473 = vst.msk [vmem:[%s299 + $0x58] sm:$0xf] %vm1450, %v1303
      %1474 = vst.msk [vmem:[%s299 + $0x5c] sm:$0xf] %vm1450, %v1305
      %1475 = vst.msk [vmem:[%s299 + $0x60] sm:$0xf] %vm1450, %v1307
      %1476 = vst.msk [vmem:[%s299 + $0x64] sm:$0xf] %vm1450, %v1309
      %1477 = vst.msk [vmem:[%s299 + $0x68] sm:$0xf] %vm1450, %v1311
      %1478 = vst.msk [vmem:[%s299 + $0x6c] sm:$0xf] %vm1450, %v1313
      %1479 = vst.msk [vmem:[%s299 + $0x70] sm:$0xf] %vm1450, %v1315
      %1480 = vst.msk [vmem:[%s299 + $0x74] sm:$0xf] %vm1450, %v1317
      %1481 = vst.msk [vmem:[%s299 + $0x78] sm:$0xf] %vm1450, %v1319
      %1482 = vst.msk [vmem:[%s299 + $0x7c] sm:$0xf] %vm1450, %v1321
      %1483 = vst.msk [vmem:[%s299 + $0x80] sm:$0xf] %vm1450, %v1323
      %1484 = vst.msk [vmem:[%s299 + $0x84] sm:$0xf] %vm1450, %v1325
      %1485 = vst.msk [vmem:[%s299 + $0x88] sm:$0xf] %vm1450, %v1327
      %1486 = vst.msk [vmem:[%s299 + $0x8c] sm:$0xf] %vm1450, %v1329
      %1487 = vst.msk [vmem:[%s299 + $0x90] sm:$0xf] %vm1450, %v1331
      %1488 = vst.msk [vmem:[%s299 + $0x94] sm:$0xf] %vm1450, %v1333
      %1489 = vst.msk [vmem:[%s299 + $0x98] sm:$0xf] %vm1450, %v1335
      %1490 = vst.msk [vmem:[%s299 + $0x9c] sm:$0xf] %vm1450, %v1337
      %1491 = vst.msk [vmem:[%s299 + $0xa0] sm:$0xf] %vm1450, %v1339
      %1492 = vst.msk [vmem:[%s299 + $0xa4] sm:$0xf] %vm1450, %v1341
      %1493 = vst.msk [vmem:[%s299 + $0xa8] sm:$0xf] %vm1450, %v1343
      %1494 = vst.msk [vmem:[%s299 + $0xac] sm:$0xf] %vm1450, %v1345
      %1495 = vst.msk [vmem:[%s299 + $0xb0] sm:$0xf] %vm1450, %v1347
      %1496 = vst.msk [vmem:[%s299 + $0xb4] sm:$0xf] %vm1450, %v1349
      %1497 = vst.msk [vmem:[%s299 + $0xb8] sm:$0xf] %vm1450, %v1351
      %1498 = vst.msk [vmem:[%s299 + $0xbc] sm:$0xf] %vm1450, %v1353
      %1499 = vst.msk [vmem:[%s299 + $0xc0] sm:$0xf] %vm1450, %v1355
      %1500 = vst.msk [vmem:[%s299 + $0xc4] sm:$0xf] %vm1450, %v1357
      %1501 = vst.msk [vmem:[%s299 + $0xc8] sm:$0xf] %vm1450, %v1359
      %1502 = vst.msk [vmem:[%s299 + $0xcc] sm:$0xf] %vm1450, %v1361
      %1503 = vst.msk [vmem:[%s299 + $0xd0] sm:$0xf] %vm1450, %v1363
      %1504 = vst.msk [vmem:[%s299 + $0xd4] sm:$0xf] %vm1450, %v1365
      %1505 = vst.msk [vmem:[%s299 + $0xd8] sm:$0xf] %vm1450, %v1367
      %1506 = vst.msk [vmem:[%s299 + $0xdc] sm:$0xf] %vm1450, %v1369
      %1507 = vst.msk [vmem:[%s299 + $0xe0] sm:$0xf] %vm1450, %v1371
      %1508 = vst.msk [vmem:[%s299 + $0xe4] sm:$0xf] %vm1450, %v1373
      %1509 = vst.msk [vmem:[%s299 + $0xe8] sm:$0xf] %vm1450, %v1375
      %1510 = vst.msk [vmem:[%s299 + $0xec] sm:$0xf] %vm1450, %v1377
      %1511 = vst.msk [vmem:[%s299 + $0xf0] sm:$0xf] %vm1450, %v1379
      %1512 = vst.msk [vmem:[%s299 + $0xf4] sm:$0xf] %vm1450, %v1381
      %1513 = vst.msk [vmem:[%s299 + $0xf8] sm:$0xf] %vm1450, %v1383
      %1514 = vst.msk [vmem:[%s299 + $0xfc] sm:$0xf] %vm1450, %v1385
      %1515 = vrot.lane.b32.xlu0 %v1065, 110
      %v1516 = vpop.permute.xlu0 %1515
      %1517 = vrot.lane.b32.xlu0 %v1066, 110
      %v1518 = vpop.permute.xlu0 %1517
      %1519 = vrot.lane.b32.xlu0 %v1067, 110
      %v1520 = vpop.permute.xlu0 %1519
      %1521 = vrot.lane.b32.xlu0 %v1068, 110
      %v1522 = vpop.permute.xlu0 %1521
      %1523 = vrot.lane.b32.xlu0 %v1069, 110
      %v1524 = vpop.permute.xlu0 %1523
      %1525 = vrot.lane.b32.xlu0 %v1070, 110
      %v1526 = vpop.permute.xlu0 %1525
      %1527 = vrot.lane.b32.xlu0 %v1071, 110
      %v1528 = vpop.permute.xlu0 %1527
      %1529 = vrot.lane.b32.xlu0 %v1072, 110
      %v1530 = vpop.permute.xlu0 %1529
      %1531 = vrot.lane.b32.xlu0 %v1073, 110
      %v1532 = vpop.permute.xlu0 %1531
      %1533 = vrot.lane.b32.xlu0 %v1074, 110
      %v1534 = vpop.permute.xlu0 %1533
      %1535 = vrot.lane.b32.xlu0 %v1075, 110
      %v1536 = vpop.permute.xlu0 %1535
      %1537 = vrot.lane.b32.xlu0 %v1076, 110
      %v1538 = vpop.permute.xlu0 %1537
      %1539 = vrot.lane.b32.xlu0 %v1077, 110
      %v1540 = vpop.permute.xlu0 %1539
      %1541 = vrot.lane.b32.xlu0 %v1078, 110
      %v1542 = vpop.permute.xlu0 %1541
      %1543 = vrot.lane.b32.xlu0 %v1079, 110
      %v1544 = vpop.permute.xlu0 %1543
      %1545 = vrot.lane.b32.xlu0 %v1080, 110
      %v1546 = vpop.permute.xlu0 %1545
      %1547 = vrot.lane.b32.xlu0 %v1081, 110
      %v1548 = vpop.permute.xlu0 %1547
      %1549 = vrot.lane.b32.xlu0 %v1082, 110
      %v1550 = vpop.permute.xlu0 %1549
      %1551 = vrot.lane.b32.xlu0 %v1083, 110
      %v1552 = vpop.permute.xlu0 %1551
      %1553 = vrot.lane.b32.xlu0 %v1084, 110
      %v1554 = vpop.permute.xlu0 %1553
      %1555 = vrot.lane.b32.xlu0 %v1085, 110
      %v1556 = vpop.permute.xlu0 %1555
      %1557 = vrot.lane.b32.xlu0 %v1086, 110
      %v1558 = vpop.permute.xlu0 %1557
      %1559 = vrot.lane.b32.xlu0 %v1087, 110
      %v1560 = vpop.permute.xlu0 %1559
      %1561 = vrot.lane.b32.xlu0 %v1088, 110
      %v1562 = vpop.permute.xlu0 %1561
      %1563 = vrot.lane.b32.xlu0 %v1089, 110
      %v1564 = vpop.permute.xlu0 %1563
      %1565 = vrot.lane.b32.xlu0 %v1090, 110
      %v1566 = vpop.permute.xlu0 %1565
      %1567 = vrot.lane.b32.xlu0 %v1091, 110
      %v1568 = vpop.permute.xlu0 %1567
      %1569 = vrot.lane.b32.xlu0 %v1092, 110
      %v1570 = vpop.permute.xlu0 %1569
      %1571 = vrot.lane.b32.xlu0 %v1093, 110
      %v1572 = vpop.permute.xlu0 %1571
      %1573 = vrot.lane.b32.xlu0 %v1094, 110
      %v1574 = vpop.permute.xlu0 %1573
      %1575 = vrot.lane.b32.xlu0 %v1095, 110
      %v1576 = vpop.permute.xlu0 %1575
      %1577 = vrot.lane.b32.xlu0 %v1096, 110
      %v1578 = vpop.permute.xlu0 %1577
      %1579 = vrot.lane.b32.xlu0 %v1097, 110
      %v1580 = vpop.permute.xlu0 %1579
      %1581 = vrot.lane.b32.xlu0 %v1098, 110
      %v1582 = vpop.permute.xlu0 %1581
      %1583 = vrot.lane.b32.xlu0 %v1099, 110
      %v1584 = vpop.permute.xlu0 %1583
      %1585 = vrot.lane.b32.xlu0 %v1100, 110
      %v1586 = vpop.permute.xlu0 %1585
      %1587 = vrot.lane.b32.xlu0 %v1101, 110
      %v1588 = vpop.permute.xlu0 %1587
      %1589 = vrot.lane.b32.xlu0 %v1102, 110
      %v1590 = vpop.permute.xlu0 %1589
      %1591 = vrot.lane.b32.xlu0 %v1103, 110
      %v1592 = vpop.permute.xlu0 %1591
      %1593 = vrot.lane.b32.xlu0 %v1104, 110
      %v1594 = vpop.permute.xlu0 %1593
      %1595 = vrot.lane.b32.xlu0 %v1105, 110
      %v1596 = vpop.permute.xlu0 %1595
      %1597 = vrot.lane.b32.xlu0 %v1106, 110
      %v1598 = vpop.permute.xlu0 %1597
      %1599 = vrot.lane.b32.xlu0 %v1107, 110
      %v1600 = vpop.permute.xlu0 %1599
      %1601 = vrot.lane.b32.xlu0 %v1108, 110
      %v1602 = vpop.permute.xlu0 %1601
      %1603 = vrot.lane.b32.xlu0 %v1109, 110
      %v1604 = vpop.permute.xlu0 %1603
      %1605 = vrot.lane.b32.xlu0 %v1110, 110
      %v1606 = vpop.permute.xlu0 %1605
      %1607 = vrot.lane.b32.xlu0 %v1111, 110
      %v1608 = vpop.permute.xlu0 %1607
      %1609 = vrot.lane.b32.xlu0 %v1112, 110
      %v1610 = vpop.permute.xlu0 %1609
      %1611 = vrot.lane.b32.xlu0 %v1113, 110
      %v1612 = vpop.permute.xlu0 %1611
      %1613 = vrot.lane.b32.xlu0 %v1114, 110
      %v1614 = vpop.permute.xlu0 %1613
      %1615 = vrot.lane.b32.xlu0 %v1115, 110
      %v1616 = vpop.permute.xlu0 %1615
      %1617 = vrot.lane.b32.xlu0 %v1116, 110
      %v1618 = vpop.permute.xlu0 %1617
      %1619 = vrot.lane.b32.xlu0 %v1117, 110
      %v1620 = vpop.permute.xlu0 %1619
      %1621 = vrot.lane.b32.xlu0 %v1118, 110
      %v1622 = vpop.permute.xlu0 %1621
      %1623 = vrot.lane.b32.xlu0 %v1119, 110
      %v1624 = vpop.permute.xlu0 %1623
      %1625 = vrot.lane.b32.xlu0 %v1120, 110
      %v1626 = vpop.permute.xlu0 %1625
      %1627 = vrot.lane.b32.xlu0 %v1121, 110
      %v1628 = vpop.permute.xlu0 %1627
      %1629 = vrot.lane.b32.xlu0 %v1122, 110
      %v1630 = vpop.permute.xlu0 %1629
      %1631 = vrot.lane.b32.xlu0 %v1123, 110
      %v1632 = vpop.permute.xlu0 %1631
      %1633 = vrot.lane.b32.xlu0 %v1124, 110
      %v1634 = vpop.permute.xlu0 %1633
      %1635 = vrot.lane.b32.xlu0 %v1125, 110
      %v1636 = vpop.permute.xlu0 %1635
      %1637 = vrot.lane.b32.xlu0 %v1126, 110
      %v1638 = vpop.permute.xlu0 %1637
      %1639 = vrot.lane.b32.xlu0 %v1127, 110
      %v1640 = vpop.permute.xlu0 %1639
      %1641 = vrot.lane.b32.xlu0 %v1128, 110
      %v1642 = vpop.permute.xlu0 %1641
      %1707 = vst.msk [vmem:[%s309] sm:$0xf] %vm1450, %v1516
      %1708 = vst.msk [vmem:[%s309 + $0x4] sm:$0xf] %vm1450, %v1518
      %1709 = vst.msk [vmem:[%s309 + $0x8] sm:$0xf] %vm1450, %v1520
      %1710 = vst.msk [vmem:[%s309 + $0xc] sm:$0xf] %vm1450, %v1522
      %1711 = vst.msk [vmem:[%s309 + $0x10] sm:$0xf] %vm1450, %v1524
      %1712 = vst.msk [vmem:[%s309 + $0x14] sm:$0xf] %vm1450, %v1526
      %1713 = vst.msk [vmem:[%s309 + $0x18] sm:$0xf] %vm1450, %v1528
      %1714 = vst.msk [vmem:[%s309 + $0x1c] sm:$0xf] %vm1450, %v1530
      %1715 = vst.msk [vmem:[%s309 + $0x20] sm:$0xf] %vm1450, %v1532
      %1716 = vst.msk [vmem:[%s309 + $0x24] sm:$0xf] %vm1450, %v1534
      %1717 = vst.msk [vmem:[%s309 + $0x28] sm:$0xf] %vm1450, %v1536
      %1718 = vst.msk [vmem:[%s309 + $0x2c] sm:$0xf] %vm1450, %v1538
      %1719 = vst.msk [vmem:[%s309 + $0x30] sm:$0xf] %vm1450, %v1540
      %1720 = vst.msk [vmem:[%s309 + $0x34] sm:$0xf] %vm1450, %v1542
      %1721 = vst.msk [vmem:[%s309 + $0x38] sm:$0xf] %vm1450, %v1544
      %1722 = vst.msk [vmem:[%s309 + $0x3c] sm:$0xf] %vm1450, %v1546
      %1723 = vst.msk [vmem:[%s309 + $0x40] sm:$0xf] %vm1450, %v1548
      %1724 = vst.msk [vmem:[%s309 + $0x44] sm:$0xf] %vm1450, %v1550
      %1725 = vst.msk [vmem:[%s309 + $0x48] sm:$0xf] %vm1450, %v1552
      %1726 = vst.msk [vmem:[%s309 + $0x4c] sm:$0xf] %vm1450, %v1554
      %1727 = vst.msk [vmem:[%s309 + $0x50] sm:$0xf] %vm1450, %v1556
      %1728 = vst.msk [vmem:[%s309 + $0x54] sm:$0xf] %vm1450, %v1558
      %1729 = vst.msk [vmem:[%s309 + $0x58] sm:$0xf] %vm1450, %v1560
      %1730 = vst.msk [vmem:[%s309 + $0x5c] sm:$0xf] %vm1450, %v1562
      %1731 = vst.msk [vmem:[%s309 + $0x60] sm:$0xf] %vm1450, %v1564
      %1732 = vst.msk [vmem:[%s309 + $0x64] sm:$0xf] %vm1450, %v1566
      %1733 = vst.msk [vmem:[%s309 + $0x68] sm:$0xf] %vm1450, %v1568
      %1734 = vst.msk [vmem:[%s309 + $0x6c] sm:$0xf] %vm1450, %v1570
      %1735 = vst.msk [vmem:[%s309 + $0x70] sm:$0xf] %vm1450, %v1572
      %1736 = vst.msk [vmem:[%s309 + $0x74] sm:$0xf] %vm1450, %v1574
      %1737 = vst.msk [vmem:[%s309 + $0x78] sm:$0xf] %vm1450, %v1576
      %1738 = vst.msk [vmem:[%s309 + $0x7c] sm:$0xf] %vm1450, %v1578
      %1739 = vst.msk [vmem:[%s309 + $0x80] sm:$0xf] %vm1450, %v1580
      %1740 = vst.msk [vmem:[%s309 + $0x84] sm:$0xf] %vm1450, %v1582
      %1741 = vst.msk [vmem:[%s309 + $0x88] sm:$0xf] %vm1450, %v1584
      %1742 = vst.msk [vmem:[%s309 + $0x8c] sm:$0xf] %vm1450, %v1586
      %1743 = vst.msk [vmem:[%s309 + $0x90] sm:$0xf] %vm1450, %v1588
      %1744 = vst.msk [vmem:[%s309 + $0x94] sm:$0xf] %vm1450, %v1590
      %1745 = vst.msk [vmem:[%s309 + $0x98] sm:$0xf] %vm1450, %v1592
      %1746 = vst.msk [vmem:[%s309 + $0x9c] sm:$0xf] %vm1450, %v1594
      %1747 = vst.msk [vmem:[%s309 + $0xa0] sm:$0xf] %vm1450, %v1596
      %1748 = vst.msk [vmem:[%s309 + $0xa4] sm:$0xf] %vm1450, %v1598
      %1749 = vst.msk [vmem:[%s309 + $0xa8] sm:$0xf] %vm1450, %v1600
      %1750 = vst.msk [vmem:[%s309 + $0xac] sm:$0xf] %vm1450, %v1602
      %1751 = vst.msk [vmem:[%s309 + $0xb0] sm:$0xf] %vm1450, %v1604
      %1752 = vst.msk [vmem:[%s309 + $0xb4] sm:$0xf] %vm1450, %v1606
      %1753 = vst.msk [vmem:[%s309 + $0xb8] sm:$0xf] %vm1450, %v1608
      %1754 = vst.msk [vmem:[%s309 + $0xbc] sm:$0xf] %vm1450, %v1610
      %1755 = vst.msk [vmem:[%s309 + $0xc0] sm:$0xf] %vm1450, %v1612
      %1756 = vst.msk [vmem:[%s309 + $0xc4] sm:$0xf] %vm1450, %v1614
      %1757 = vst.msk [vmem:[%s309 + $0xc8] sm:$0xf] %vm1450, %v1616
      %1758 = vst.msk [vmem:[%s309 + $0xcc] sm:$0xf] %vm1450, %v1618
      %1759 = vst.msk [vmem:[%s309 + $0xd0] sm:$0xf] %vm1450, %v1620
      %1760 = vst.msk [vmem:[%s309 + $0xd4] sm:$0xf] %vm1450, %v1622
      %1761 = vst.msk [vmem:[%s309 + $0xd8] sm:$0xf] %vm1450, %v1624
      %1762 = vst.msk [vmem:[%s309 + $0xdc] sm:$0xf] %vm1450, %v1626
      %1763 = vst.msk [vmem:[%s309 + $0xe0] sm:$0xf] %vm1450, %v1628
      %1764 = vst.msk [vmem:[%s309 + $0xe4] sm:$0xf] %vm1450, %v1630
      %1765 = vst.msk [vmem:[%s309 + $0xe8] sm:$0xf] %vm1450, %v1632
      %1766 = vst.msk [vmem:[%s309 + $0xec] sm:$0xf] %vm1450, %v1634
      %1767 = vst.msk [vmem:[%s309 + $0xf0] sm:$0xf] %vm1450, %v1636
      %1768 = vst.msk [vmem:[%s309 + $0xf4] sm:$0xf] %vm1450, %v1638
      %1769 = vst.msk [vmem:[%s309 + $0xf8] sm:$0xf] %vm1450, %v1640
      %1770 = vst.msk [vmem:[%s309 + $0xfc] sm:$0xf] %vm1450, %v1642
      %s1771 = smul.u32 64, %s22
      %p1772 = scmp.lt.s32.totalorder %s21, 1
      %s1773 = scalar_select %p1772, %s21, 1
      %p1774 = scmp.lt.s32.totalorder %s1771, 127
      %s1775 = scalar_select %p1774, %s1771, 127
      %s1776 = smul.addr %s1773, 128
      %s1777 = sadd.s32 %s1775, %s1776
      %s1778 = smul.addr %s1777, 4
      %s1779 = scalar_lea.vmem %s3, %s1778
      %s1780 = smul.u32 64, %s22
      %p1781 = scmp.lt.s32.totalorder %s21, 1
      %s1782 = scalar_select %p1781, %s21, 1
      %p1783 = scmp.lt.s32.totalorder %s1780, 127
      %s1784 = scalar_select %p1783, %s1780, 127
      %s1785 = smul.addr %s1782, 128
      %s1786 = sadd.s32 %s1784, %s1785
      %s1787 = smul.addr %s1786, 4
      %s1788 = scalar_lea.vmem %s4, %s1787
      %s1789 = smul.u32 64, %s22
      %p1790 = scmp.lt.s32.totalorder %s21, 1
      %s1791 = scalar_select %p1790, %s21, 1
      %p1792 = scmp.lt.s32.totalorder %s1789, 127
      %s1793 = scalar_select %p1792, %s1789, 127
      %s1794 = smul.addr %s1791, 128
      %s1795 = sadd.s32 %s1793, %s1794
      %s1796 = smul.addr %s1795, 4
      %s1797 = scalar_lea.vmem %s5, %s1796
      // Predicated region
      $region33: #{tpu_custom_call.1} parent=31 // pred_check
        %p1798 = pneg %p119
      $region34: #{tpu_custom_call.1} parent=31 // pred_check_branch
        %1800 = sbr.rel (%p1798) target = $region36
      $region35: #{tpu_custom_call.1} parent=31 // pred_region
        %s1801 = smul.u32 64, %s22
      $region36: #{tpu_custom_call.1} parent=31 // pred_fallthru
        _
      // Predicated region
      $region37: #{tpu_custom_call.1} parent=31 // pred_check
        %p1802 = pneg %p147
      $region38: #{tpu_custom_call.1} parent=31 // pred_check_branch
        %1804 = sbr.rel (%p1802) target = $region40
      $region39: #{tpu_custom_call.1} parent=31 // pred_region
        %s1805 = smul.u32 64, %s22
      $region40: #{tpu_custom_call.1} parent=31 // pred_fallthru
        _
      // Predicated region
      $region41: #{tpu_custom_call.1} parent=31 // pred_check
        %p1806 = pneg %p175
      $region42: #{tpu_custom_call.1} parent=31 // pred_check_branch
        %1808 = sbr.rel (%p1806) target = $region44
      $region43: #{tpu_custom_call.1} parent=31 // pred_region
        %s1809 = smul.u32 64, %s22
      $region44: #{tpu_custom_call.1} parent=31 // pred_fallthru
        _
    $region32: #{tpu_custom_call.1} parent=5 // pred_fallthru
      _
    %p1810 = scmp.le.s32.totalorder 2, %s12
    // Predicated region
    $region45: #{tpu_custom_call.1} parent=5 // pred_check
      %p1811 = pneg %p1810
    $region46: #{tpu_custom_call.1} parent=5 // pred_check_branch
      %1813 = sbr.rel (%p1811) target = $region48
    $region47: #{tpu_custom_call.1} parent=5 // pred_region
      %s1814 = ssub.s32 %s12, 2
      // Predicated region
      $region49: #{tpu_custom_call.1} parent=47 // pred_check
        %p1815 = pneg %p125
      $region50: #{tpu_custom_call.1} parent=47 // pred_check_branch
        %1817 = sbr.rel (%p1815) target = $region52
      $region51: #{tpu_custom_call.1} parent=47 // pred_region
        %s1818 = smul.u32 64, %s24
        %p1819 = scmp.lt.s32.totalorder %s23, 1
        %s1820 = scalar_select %p1819, %s23, 1
        %p1821 = scmp.lt.s32.totalorder %s1818, 127
        %s1822 = scalar_select %p1821, %s1818, 127
        %s1823 = smul.addr %s1820, 128
        %s1824 = sadd.s32 %s1822, %s1823
        %s1825 = smul.addr %s1824, 4
        %s1826 = scalar_lea.vmem %s3, %s1825
      $region52: #{tpu_custom_call.1} parent=47 // pred_fallthru
        _
      // Predicated region
      $region53: #{tpu_custom_call.1} parent=47 // pred_check
        %p1827 = pneg %p153
      $region54: #{tpu_custom_call.1} parent=47 // pred_check_branch
        %1829 = sbr.rel (%p1827) target = $region56
      $region55: #{tpu_custom_call.1} parent=47 // pred_region
        %s1830 = smul.u32 64, %s24
        %p1831 = scmp.lt.s32.totalorder %s23, 1
        %s1832 = scalar_select %p1831, %s23, 1
        %p1833 = scmp.lt.s32.totalorder %s1830, 127
        %s1834 = scalar_select %p1833, %s1830, 127
        %s1835 = smul.addr %s1832, 128
        %s1836 = sadd.s32 %s1834, %s1835
        %s1837 = smul.addr %s1836, 4
        %s1838 = scalar_lea.vmem %s4, %s1837
      $region56: #{tpu_custom_call.1} parent=47 // pred_fallthru
        _
      // Predicated region
      $region57: #{tpu_custom_call.1} parent=47 // pred_check
        %p1839 = pneg %p181
      $region58: #{tpu_custom_call.1} parent=47 // pred_check_branch
        %1841 = sbr.rel (%p1839) target = $region60
      $region59: #{tpu_custom_call.1} parent=47 // pred_region
        %s1842 = smul.u32 64, %s24
        %p1843 = scmp.lt.s32.totalorder %s23, 1
        %s1844 = scalar_select %p1843, %s23, 1
        %p1845 = scmp.lt.s32.totalorder %s1842, 127
        %s1846 = scalar_select %p1845, %s1842, 127
        %s1847 = smul.addr %s1844, 128
        %s1848 = sadd.s32 %s1846, %s1847
        %s1849 = smul.addr %s1848, 4
        %s1850 = scalar_lea.vmem %s5, %s1849
      $region60: #{tpu_custom_call.1} parent=47 // pred_fallthru
        _
    $region48: #{tpu_custom_call.1} parent=5 // pred_fallthru
      _
  $region6: #{tpu_custom_call.1} parent=0 // loop_footer
    %s16 = sadd.s32 1, %s12
  $region7: #{tpu_custom_call.1} parent=0 // loop_footer_branch
    %11 = sbr.rel target = $region3
  $region8: #{tpu_custom_call.1} parent=0 // loop_exit
    _

</llo_original>
